<compile_context>
chip_gen: v6e
topology: v6e:2x2x1
jax: 0.10.0
libtpu: 0.0.40
codegen_flags: <defaults>
</compile_context>

<pallas_src>
import functools

import jax
import jax.numpy as jnp
from jax.experimental import pallas as pl
from jax.experimental.pallas import tpu as pltpu

BN_EPS = 1e-5
_VMEM_LIMIT = 32 * 1024 * 1024


def _conv_stats_kernel(x_ref, w_ref, conv_ref, stats_ref, *, h, w, cin, cout):
    """Per-image 3x3 'same' conv + per-channel partial BN statistics.

    x_ref:     (1, Cin, H+2, W+2) bf16  zero-padded input image
    w_ref:     (9, Cout, Cin)     bf16  weight, k = kh*3 + kw
    conv_ref:  (1, Cout, H*W)     f32   conv output (spatial flattened into lanes)
    stats_ref: (1, Cout, 2)       f32   per-image [sum, sum_of_squares] per channel
    """
    xp = x_ref[0]                                                # (Cin, H+2, W+2)
    acc = jnp.zeros((cout, h * w), jnp.float32)
    for k in range(9):                                           # static, unrolled
        kh, kw = divmod(k, 3)
        win = xp[:, kh:kh + h, kw:kw + w].reshape(cin, h * w)    # (Cin, H*W) bf16
        acc = acc + jnp.dot(w_ref[k], win,
                            preferred_element_type=jnp.float32)  # MXU, f32 acc
    conv_ref[0] = acc
    s = jnp.sum(acc, axis=1, keepdims=True)                      # (Cout, 1)
    q = jnp.sum(acc * acc, axis=1, keepdims=True)                # (Cout, 1)
    stats_ref[0] = jnp.concatenate([s, q], axis=1)               # (Cout, 2)


def _bn_relu_kernel(sb_ref, conv_ref, o_ref):
    """y = relu(conv * scale + bias) with per-channel scale/bias (f32)."""
    y = conv_ref[0]                                              # (Cout, H*W) f32
    scale = sb_ref[:, 0:1]                                       # (Cout, 1)
    bias = sb_ref[:, 1:2]                                        # (Cout, 1)
    o_ref[0] = jnp.maximum(y * scale + bias, 0.0).astype(o_ref.dtype)


@jax.jit
def cbrblock_forward(x_nchw, conv_weight):
    """x_nchw: (N, Cin, H, W) f32; conv_weight: (Cout, Cin, 3, 3) f32 -> (N, Cout, H, W) f32."""
    n, cin, h, w = x_nchw.shape
    cout = conv_weight.shape[0]
    hw = h * w

    # 'same' zero padding + bf16 cast for MXU (single cheap elementwise pass).
    x_pad = jnp.pad(x_nchw, ((0, 0), (0, 0), (1, 1), (1, 1))).astype(jnp.bfloat16)
    # (Cout, Cin, kh, kw) -> (kh, kw, Cout, Cin) -> (9, Cout, Cin)
    w9 = conv_weight.transpose(2, 3, 0, 1).reshape(9, cout, cin).astype(jnp.bfloat16)

    # ---- Pass 1: conv (9 matmuls) + per-image partial BN stats -----------------
    conv_flat, stats = pl.pallas_call(
        functools.partial(_conv_stats_kernel, h=h, w=w, cin=cin, cout=cout),
        grid=(n,),
        in_specs=[
            pl.BlockSpec((1, cin, h + 2, w + 2), lambda i: (i, 0, 0, 0)),
            pl.BlockSpec((9, cout, cin), lambda i: (0, 0, 0)),
        ],
        out_specs=(
            pl.BlockSpec((1, cout, hw), lambda i: (i, 0, 0)),
            pl.BlockSpec((1, cout, 2), lambda i: (i, 0, 0)),
        ),
        out_shape=(
            jax.ShapeDtypeStruct((n, cout, hw), jnp.float32),
            jax.ShapeDtypeStruct((n, cout, 2), jnp.float32),
        ),
        compiler_params=pltpu.CompilerParams(
            dimension_semantics=("parallel",),
            vmem_limit_bytes=_VMEM_LIMIT,
        ),
        cost_estimate=pl.CostEstimate(
            flops=2 * n * hw * cin * 9 * cout,
            transcendentals=0,
            bytes_accessed=(x_pad.size * 2 + w9.size * 2
                            + n * cout * hw * 4 + n * cout * 2 * 4),
        ),
    )(x_pad, w9)

    # ---- Tiny global BN-stat reduction + scale/bias (f32, negligible cost) -----
    count = jnp.float32(n * hw)
    s = jnp.sum(stats[:, :, 0], axis=0)                  # (Cout,) sum x
    q = jnp.sum(stats[:, :, 1], axis=0)                  # (Cout,) sum x^2
    mean = s / count
    var = q / count - mean * mean                        # biased variance (f32)
    rstd = jax.lax.rsqrt(var + BN_EPS)
    scale = rstd                                         # gamma = 1
    bias = -mean * rstd                                  # beta = 0
    sb = jnp.stack([scale, bias], axis=1)                # (Cout, 2) f32

    # ---- Pass 2: normalize + ReLU (mem-bound, lane-dense stores) ----------------
    out_flat = pl.pallas_call(
        _bn_relu_kernel,
        grid=(n,),
        in_specs=[
            pl.BlockSpec((cout, 2), lambda i: (0, 0)),
            pl.BlockSpec((1, cout, hw), lambda i: (i, 0, 0)),
        ],
        out_specs=pl.BlockSpec((1, cout, hw), lambda i: (i, 0, 0)),
        out_shape=jax.ShapeDtypeStruct((n, cout, hw), jnp.float32),
        compiler_params=pltpu.CompilerParams(
            dimension_semantics=("parallel",),
            vmem_limit_bytes=_VMEM_LIMIT,
        ),
        cost_estimate=pl.CostEstimate(
            flops=3 * n * cout * hw,
            transcendentals=0,
            bytes_accessed=2 * n * cout * hw * 4 + cout * 2 * 4,
        ),
    )(sb, conv_flat)

    # Free metadata reshape (row-major split of the last dim) back to NCHW.
    return out_flat.reshape(n, cout, h, w)


def _reference(x_nchw, conv_weight):
    # Pure-JAX reference; inputs rounded to bf16 to match the kernel's MXU inputs,
    # all math in f32.
    xb = x_nchw.astype(jnp.bfloat16).astype(jnp.float32)
    wb = conv_weight.astype(jnp.bfloat16).astype(jnp.float32)
    conv = jax.lax.conv_general_dilated(
        xb, wb, window_strides=(1, 1), padding="SAME",
        dimension_numbers=("NCHW", "OIHW", "NCHW"))
    mean = jnp.mean(conv, axis=(0, 2, 3), keepdims=True)
    var = jnp.mean((conv - mean) ** 2, axis=(0, 2, 3), keepdims=True)
    return jnp.maximum((conv - mean) * jax.lax.rsqrt(var + BN_EPS), 0.0)


if __name__ == "__main__":
    key = jax.random.PRNGKey(0)
    k_x, k_w = jax.random.split(key)

    N, CIN, COUT, H, W = 2, 4, 8, 16, 16
    x = jax.random.normal(k_x, (N, CIN, H, W), dtype=jnp.float32)
    # Deterministic Conv2d weight init (kaiming-uniform-like bound, synthetic).
    fan_in = CIN * 3 * 3
    bound = 1.0 / (fan_in ** 0.5)
    conv_w = jax.random.uniform(k_w, (COUT, CIN, 3, 3),
                                dtype=jnp.float32, minval=-bound, maxval=bound)

    out = jax.block_until_ready(cbrblock_forward(x, conv_w))
    ref = _reference(x, conv_w)

    assert out.shape == (N, COUT, H, W)
    assert out.dtype == jnp.float32
    max_err = float(jnp.max(jnp.abs(out - ref)))
    assert jnp.allclose(out, ref, atol=5e-3, rtol=5e-3), f"max abs err = {max_err}"

    print("KERNEL_OK")
</pallas_src>

<mosaic_0001>
module attributes {stable_mosaic.version = 11 : i64} {
  func.func @_conv_stats_kernel(%arg0: i32, %arg1: memref<1x4x18x18xbf16, #tpu.memory_space<vmem>>, %arg2: memref<9x8x4xbf16, #tpu.memory_space<vmem>>, %arg3: memref<1x8x256xf32, #tpu.memory_space<vmem>>, %arg4: memref<1x8x2xf32, #tpu.memory_space<vmem>>) attributes {dimension_semantics = [#tpu.dimension_semantics<parallel>], iteration_bounds = array<i64: 2>, scalar_prefetch = 0 : i64, scratch_operands = 0 : i64, tpu.core_type = #tpu.core_type<tc>, window_params = [{transform_indices = @transform_0, window_bounds = array<i64: 1, 4, 18, 18>}, {pipeline_mode = #tpu.pipeline_mode<synchronous>, transform_indices = @transform_1, window_bounds = array<i64: 9, 8, 4>}, {transform_indices = @transform_2, window_bounds = array<i64: 1, 8, 256>}, {transform_indices = @transform_3, window_bounds = array<i64: 1, 8, 2>}]} {
    %c0 = arith.constant 0 : index
    %c0_0 = arith.constant 0 : index
    %c0_1 = arith.constant 0 : index
    %c0_2 = arith.constant 0 : index
    %0 = vector.load %arg1[%c0, %c0_0, %c0_1, %c0_2] : memref<1x4x18x18xbf16, #tpu.memory_space<vmem>>, vector<1x4x18x18xbf16>
    %1 = vector.shape_cast %0 : vector<1x4x18x18xbf16> to vector<4x18x18xbf16>
    %cst = arith.constant 0.000000e+00 : f32
    %2 = vector.broadcast %cst : f32 to vector<8x256xf32>
    %3 = vector.extract_strided_slice %1 {offsets = [0, 0, 0], sizes = [4, 16, 16], strides = [1, 1, 1]} : vector<4x18x18xbf16> to vector<4x16x16xbf16>
    %4 = vector.shape_cast %3 : vector<4x16x16xbf16> to vector<4x256xbf16>
    %c0_3 = arith.constant 0 : index
    %c0_4 = arith.constant 0 : index
    %c0_5 = arith.constant 0 : index
    %5 = vector.load %arg2[%c0_3, %c0_4, %c0_5] : memref<9x8x4xbf16, #tpu.memory_space<vmem>>, vector<1x8x4xbf16>
    %6 = vector.shape_cast %5 : vector<1x8x4xbf16> to vector<8x4xbf16>
    %cst_6 = arith.constant dense<0.000000e+00> : vector<8x256xf32>
    %7 = tpu.matmul %6, %4, %cst_6 {dimension_numbers = #tpu.dot_dimension_numbers<[1], [0], [0], [1], [0, 0, 1, 1], [], []>} : vector<8x4xbf16>, vector<4x256xbf16>, vector<8x256xf32> -> vector<8x256xf32>
    %8 = arith.addf %2, %7 : vector<8x256xf32>
    %9 = vector.extract_strided_slice %1 {offsets = [0, 0, 1], sizes = [4, 16, 16], strides = [1, 1, 1]} : vector<4x18x18xbf16> to vector<4x16x16xbf16>
    %10 = vector.shape_cast %9 : vector<4x16x16xbf16> to vector<4x256xbf16>
    %c1 = arith.constant 1 : index
    %c0_7 = arith.constant 0 : index
    %c0_8 = arith.constant 0 : index
    %11 = vector.load %arg2[%c1, %c0_7, %c0_8] : memref<9x8x4xbf16, #tpu.memory_space<vmem>>, vector<1x8x4xbf16>
    %12 = vector.shape_cast %11 : vector<1x8x4xbf16> to vector<8x4xbf16>
    %cst_9 = arith.constant dense<0.000000e+00> : vector<8x256xf32>
    %13 = tpu.matmul %12, %10, %cst_9 {dimension_numbers = #tpu.dot_dimension_numbers<[1], [0], [0], [1], [0, 0, 1, 1], [], []>} : vector<8x4xbf16>, vector<4x256xbf16>, vector<8x256xf32> -> vector<8x256xf32>
    %14 = arith.addf %8, %13 : vector<8x256xf32>
    %15 = vector.extract_strided_slice %1 {offsets = [0, 0, 2], sizes = [4, 16, 16], strides = [1, 1, 1]} : vector<4x18x18xbf16> to vector<4x16x16xbf16>
    %16 = vector.shape_cast %15 : vector<4x16x16xbf16> to vector<4x256xbf16>
    %c2 = arith.constant 2 : index
    %c0_10 = arith.constant 0 : index
    %c0_11 = arith.constant 0 : index
    %17 = vector.load %arg2[%c2, %c0_10, %c0_11] : memref<9x8x4xbf16, #tpu.memory_space<vmem>>, vector<1x8x4xbf16>
    %18 = vector.shape_cast %17 : vector<1x8x4xbf16> to vector<8x4xbf16>
    %cst_12 = arith.constant dense<0.000000e+00> : vector<8x256xf32>
    %19 = tpu.matmul %18, %16, %cst_12 {dimension_numbers = #tpu.dot_dimension_numbers<[1], [0], [0], [1], [0, 0, 1, 1], [], []>} : vector<8x4xbf16>, vector<4x256xbf16>, vector<8x256xf32> -> vector<8x256xf32>
    %20 = arith.addf %14, %19 : vector<8x256xf32>
    %21 = vector.extract_strided_slice %1 {offsets = [0, 1, 0], sizes = [4, 16, 16], strides = [1, 1, 1]} : vector<4x18x18xbf16> to vector<4x16x16xbf16>
    %22 = vector.shape_cast %21 : vector<4x16x16xbf16> to vector<4x256xbf16>
    %c3 = arith.constant 3 : index
    %c0_13 = arith.constant 0 : index
    %c0_14 = arith.constant 0 : index
    %23 = vector.load %arg2[%c3, %c0_13, %c0_14] : memref<9x8x4xbf16, #tpu.memory_space<vmem>>, vector<1x8x4xbf16>
    %24 = vector.shape_cast %23 : vector<1x8x4xbf16> to vector<8x4xbf16>
    %cst_15 = arith.constant dense<0.000000e+00> : vector<8x256xf32>
    %25 = tpu.matmul %24, %22, %cst_15 {dimension_numbers = #tpu.dot_dimension_numbers<[1], [0], [0], [1], [0, 0, 1, 1], [], []>} : vector<8x4xbf16>, vector<4x256xbf16>, vector<8x256xf32> -> vector<8x256xf32>
    %26 = arith.addf %20, %25 : vector<8x256xf32>
    %27 = vector.extract_strided_slice %1 {offsets = [0, 1, 1], sizes = [4, 16, 16], strides = [1, 1, 1]} : vector<4x18x18xbf16> to vector<4x16x16xbf16>
    %28 = vector.shape_cast %27 : vector<4x16x16xbf16> to vector<4x256xbf16>
    %c4 = arith.constant 4 : index
    %c0_16 = arith.constant 0 : index
    %c0_17 = arith.constant 0 : index
    %29 = vector.load %arg2[%c4, %c0_16, %c0_17] : memref<9x8x4xbf16, #tpu.memory_space<vmem>>, vector<1x8x4xbf16>
    %30 = vector.shape_cast %29 : vector<1x8x4xbf16> to vector<8x4xbf16>
    %cst_18 = arith.constant dense<0.000000e+00> : vector<8x256xf32>
    %31 = tpu.matmul %30, %28, %cst_18 {dimension_numbers = #tpu.dot_dimension_numbers<[1], [0], [0], [1], [0, 0, 1, 1], [], []>} : vector<8x4xbf16>, vector<4x256xbf16>, vector<8x256xf32> -> vector<8x256xf32>
    %32 = arith.addf %26, %31 : vector<8x256xf32>
    %33 = vector.extract_strided_slice %1 {offsets = [0, 1, 2], sizes = [4, 16, 16], strides = [1, 1, 1]} : vector<4x18x18xbf16> to vector<4x16x16xbf16>
    %34 = vector.shape_cast %33 : vector<4x16x16xbf16> to vector<4x256xbf16>
    %c5 = arith.constant 5 : index
    %c0_19 = arith.constant 0 : index
    %c0_20 = arith.constant 0 : index
    %35 = vector.load %arg2[%c5, %c0_19, %c0_20] : memref<9x8x4xbf16, #tpu.memory_space<vmem>>, vector<1x8x4xbf16>
    %36 = vector.shape_cast %35 : vector<1x8x4xbf16> to vector<8x4xbf16>
    %cst_21 = arith.constant dense<0.000000e+00> : vector<8x256xf32>
    %37 = tpu.matmul %36, %34, %cst_21 {dimension_numbers = #tpu.dot_dimension_numbers<[1], [0], [0], [1], [0, 0, 1, 1], [], []>} : vector<8x4xbf16>, vector<4x256xbf16>, vector<8x256xf32> -> vector<8x256xf32>
    %38 = arith.addf %32, %37 : vector<8x256xf32>
    %39 = vector.extract_strided_slice %1 {offsets = [0, 2, 0], sizes = [4, 16, 16], strides = [1, 1, 1]} : vector<4x18x18xbf16> to vector<4x16x16xbf16>
    %40 = vector.shape_cast %39 : vector<4x16x16xbf16> to vector<4x256xbf16>
    %c6 = arith.constant 6 : index
    %c0_22 = arith.constant 0 : index
    %c0_23 = arith.constant 0 : index
    %41 = vector.load %arg2[%c6, %c0_22, %c0_23] : memref<9x8x4xbf16, #tpu.memory_space<vmem>>, vector<1x8x4xbf16>
    %42 = vector.shape_cast %41 : vector<1x8x4xbf16> to vector<8x4xbf16>
    %cst_24 = arith.constant dense<0.000000e+00> : vector<8x256xf32>
    %43 = tpu.matmul %42, %40, %cst_24 {dimension_numbers = #tpu.dot_dimension_numbers<[1], [0], [0], [1], [0, 0, 1, 1], [], []>} : vector<8x4xbf16>, vector<4x256xbf16>, vector<8x256xf32> -> vector<8x256xf32>
    %44 = arith.addf %38, %43 : vector<8x256xf32>
    %45 = vector.extract_strided_slice %1 {offsets = [0, 2, 1], sizes = [4, 16, 16], strides = [1, 1, 1]} : vector<4x18x18xbf16> to vector<4x16x16xbf16>
    %46 = vector.shape_cast %45 : vector<4x16x16xbf16> to vector<4x256xbf16>
    %c7 = arith.constant 7 : index
    %c0_25 = arith.constant 0 : index
    %c0_26 = arith.constant 0 : index
    %47 = vector.load %arg2[%c7, %c0_25, %c0_26] : memref<9x8x4xbf16, #tpu.memory_space<vmem>>, vector<1x8x4xbf16>
    %48 = vector.shape_cast %47 : vector<1x8x4xbf16> to vector<8x4xbf16>
    %cst_27 = arith.constant dense<0.000000e+00> : vector<8x256xf32>
    %49 = tpu.matmul %48, %46, %cst_27 {dimension_numbers = #tpu.dot_dimension_numbers<[1], [0], [0], [1], [0, 0, 1, 1], [], []>} : vector<8x4xbf16>, vector<4x256xbf16>, vector<8x256xf32> -> vector<8x256xf32>
    %50 = arith.addf %44, %49 : vector<8x256xf32>
    %51 = vector.extract_strided_slice %1 {offsets = [0, 2, 2], sizes = [4, 16, 16], strides = [1, 1, 1]} : vector<4x18x18xbf16> to vector<4x16x16xbf16>
    %52 = vector.shape_cast %51 : vector<4x16x16xbf16> to vector<4x256xbf16>
    %c8 = arith.constant 8 : index
    %c0_28 = arith.constant 0 : index
    %c0_29 = arith.constant 0 : index
    %53 = vector.load %arg2[%c8, %c0_28, %c0_29] : memref<9x8x4xbf16, #tpu.memory_space<vmem>>, vector<1x8x4xbf16>
    %54 = vector.shape_cast %53 : vector<1x8x4xbf16> to vector<8x4xbf16>
    %cst_30 = arith.constant dense<0.000000e+00> : vector<8x256xf32>
    %55 = tpu.matmul %54, %52, %cst_30 {dimension_numbers = #tpu.dot_dimension_numbers<[1], [0], [0], [1], [0, 0, 1, 1], [], []>} : vector<8x4xbf16>, vector<4x256xbf16>, vector<8x256xf32> -> vector<8x256xf32>
    %56 = arith.addf %50, %55 : vector<8x256xf32>
    %c0_31 = arith.constant 0 : index
    %c0_32 = arith.constant 0 : index
    %c0_33 = arith.constant 0 : index
    %57 = vector.load %arg3[%c0_31, %c0_32, %c0_33] : memref<1x8x256xf32, #tpu.memory_space<vmem>>, vector<1x8x256xf32>
    %58 = vector.shape_cast %57 : vector<1x8x256xf32> to vector<8x256xf32>
    %59 = vector.shape_cast %56 : vector<8x256xf32> to vector<1x8x256xf32>
    tpu.vector_store %arg3[%c0_31, %c0_32, %c0_33], %59 {strides = array<i32>} : memref<1x8x256xf32, #tpu.memory_space<vmem>>, vector<1x8x256xf32>,
    %cst_34 = arith.constant dense<0.000000e+00> : vector<8xf32>
    %60 = vector.multi_reduction <add>, %56, %cst_34 [1] : vector<8x256xf32> to vector<8xf32>
    %61 = vector.shape_cast %60 : vector<8xf32> to vector<8x1xf32>
    %62 = arith.mulf %56, %56 : vector<8x256xf32>
    %cst_35 = arith.constant dense<0.000000e+00> : vector<8xf32>
    %63 = vector.multi_reduction <add>, %62, %cst_35 [1] : vector<8x256xf32> to vector<8xf32>
    %64 = vector.shape_cast %63 : vector<8xf32> to vector<8x1xf32>
    %65 = tpu.concatenate %61, %64 in 1 : vector<8x1xf32>, vector<8x1xf32> -> vector<8x2xf32>
    %c0_36 = arith.constant 0 : index
    %c0_37 = arith.constant 0 : index
    %c0_38 = arith.constant 0 : index
    %66 = vector.load %arg4[%c0_36, %c0_37, %c0_38] : memref<1x8x2xf32, #tpu.memory_space<vmem>>, vector<1x8x2xf32>
    %67 = vector.shape_cast %66 : vector<1x8x2xf32> to vector<8x2xf32>
    %68 = vector.shape_cast %65 : vector<8x2xf32> to vector<1x8x2xf32>
    tpu.vector_store %arg4[%c0_36, %c0_37, %c0_38], %68 {strides = array<i32>} : memref<1x8x2xf32, #tpu.memory_space<vmem>>, vector<1x8x2xf32>,
    return
  }
  func.func @transform_0(%arg0: i32) -> (i32, i32, i32, i32) {
    %c0_i32 = arith.constant 0 : i32
    %c0_i32_0 = arith.constant 0 : i32
    %c0_i32_1 = arith.constant 0 : i32
    %c0_i32_2 = arith.constant 0 : i32
    return %arg0, %c0_i32, %c0_i32_0, %c0_i32_1 : i32, i32, i32, i32
  }
  func.func @transform_1(%arg0: i32) -> (i32, i32, i32) {
    %c0_i32 = arith.constant 0 : i32
    %c0_i32_0 = arith.constant 0 : i32
    %c0_i32_1 = arith.constant 0 : i32
    %c0_i32_2 = arith.constant 0 : i32
    return %c0_i32, %c0_i32_0, %c0_i32_1 : i32, i32, i32
  }
  func.func @transform_2(%arg0: i32) -> (i32, i32, i32) {
    %c0_i32 = arith.constant 0 : i32
    %c0_i32_0 = arith.constant 0 : i32
    %c0_i32_1 = arith.constant 0 : i32
    return %arg0, %c0_i32, %c0_i32_0 : i32, i32, i32
  }
  func.func @transform_3(%arg0: i32) -> (i32, i32, i32) {
    %c0_i32 = arith.constant 0 : i32
    %c0_i32_0 = arith.constant 0 : i32
    %c0_i32_1 = arith.constant 0 : i32
    return %arg0, %c0_i32, %c0_i32_0 : i32, i32, i32
  }
}

module attributes {stable_mosaic.version = 11 : i64} {
  func.func @_bn_relu_kernel(%arg0: i32, %arg1: memref<8x2xf32, #tpu.memory_space<vmem>>, %arg2: memref<1x8x256xf32, #tpu.memory_space<vmem>>, %arg3: memref<1x8x256xf32, #tpu.memory_space<vmem>>) attributes {dimension_semantics = [#tpu.dimension_semantics<parallel>], iteration_bounds = array<i64: 2>, scalar_prefetch = 0 : i64, scratch_operands = 0 : i64, tpu.core_type = #tpu.core_type<tc>, window_params = [{pipeline_mode = #tpu.pipeline_mode<synchronous>, transform_indices = @transform_0, window_bounds = array<i64: 8, 2>}, {transform_indices = @transform_1, window_bounds = array<i64: 1, 8, 256>}, {transform_indices = @transform_2, window_bounds = array<i64: 1, 8, 256>}]} {
    %c0 = arith.constant 0 : index
    %c0_0 = arith.constant 0 : index
    %c0_1 = arith.constant 0 : index
    %0 = vector.load %arg2[%c0, %c0_0, %c0_1] : memref<1x8x256xf32, #tpu.memory_space<vmem>>, vector<1x8x256xf32>
    %1 = vector.shape_cast %0 : vector<1x8x256xf32> to vector<8x256xf32>
    %c0_2 = arith.constant 0 : index
    %c0_3 = arith.constant 0 : index
    %2 = vector.load %arg1[%c0_2, %c0_3] : memref<8x2xf32, #tpu.memory_space<vmem>>, vector<8x1xf32>
    %c0_4 = arith.constant 0 : index
    %c1 = arith.constant 1 : index
    %3 = vector.load %arg1[%c0_4, %c1] : memref<8x2xf32, #tpu.memory_space<vmem>>, vector<8x1xf32>
    %4 = vector.broadcast %2 : vector<8x1xf32> to vector<8x256xf32>
    %5 = arith.mulf %1, %4 : vector<8x256xf32>
    %6 = vector.broadcast %3 : vector<8x1xf32> to vector<8x256xf32>
    %7 = arith.addf %5, %6 : vector<8x256xf32>
    %cst = arith.constant 0.000000e+00 : f32
    %8 = vector.broadcast %cst : f32 to vector<8x256xf32>
    %9 = arith.maximumf %7, %8 : vector<8x256xf32>
    %c0_5 = arith.constant 0 : index
    %c0_6 = arith.constant 0 : index
    %c0_7 = arith.constant 0 : index
    %10 = vector.load %arg3[%c0_5, %c0_6, %c0_7] : memref<1x8x256xf32, #tpu.memory_space<vmem>>, vector<1x8x256xf32>
    %11 = vector.shape_cast %10 : vector<1x8x256xf32> to vector<8x256xf32>
    %12 = vector.shape_cast %9 : vector<8x256xf32> to vector<1x8x256xf32>
    tpu.vector_store %arg3[%c0_5, %c0_6, %c0_7], %12 {strides = array<i32>} : memref<1x8x256xf32, #tpu.memory_space<vmem>>, vector<1x8x256xf32>,
    return
  }
  func.func @transform_0(%arg0: i32) -> (i32, i32) {
    %c0_i32 = arith.constant 0 : i32
    %c0_i32_0 = arith.constant 0 : i32
    %c0_i32_1 = arith.constant 0 : i32
    return %c0_i32, %c0_i32_0 : i32, i32
  }
  func.func @transform_1(%arg0: i32) -> (i32, i32, i32) {
    %c0_i32 = arith.constant 0 : i32
    %c0_i32_0 = arith.constant 0 : i32
    %c0_i32_1 = arith.constant 0 : i32
    return %arg0, %c0_i32, %c0_i32_0 : i32, i32, i32
  }
  func.func @transform_2(%arg0: i32) -> (i32, i32, i32) {
    %c0_i32 = arith.constant 0 : i32
    %c0_i32_0 = arith.constant 0 : i32
    %c0_i32_1 = arith.constant 0 : i32
    return %arg0, %c0_i32, %c0_i32_0 : i32, i32, i32
  }
}

</mosaic_0001>

<llo_original>
// kernel: cbrblock_forward.3
$region0: #{cbrblock_forward.3}
  #allocation0 [shape = 'u32[]', space=smem, size = 0x4, offset = 0x4, fixed_abs, tag = 'smem constant byte address 0x4 - core index']
  #allocation1 [shape = 'u32[144,128]{1,0:T(1,128)}', space=vmem, size = 0x12000, scoped, tag = 'internal scratch']
  %s0 = inlined_call_operand.vmem [shape: f32[8,2], index: 0, kind: input, shape index: {}]
  %s1 = inlined_call_operand.vmem [shape: f32[2,8,256], index: 1, kind: input, shape index: {}]
  %s2 = inlined_call_operand.vmem [shape: f32[2,8,256], index: 2, kind: output, shape index: {}]
  %s3 = sld [smem:[#allocation0]]
  $region41: #{cbrblock_forward.3} parent=0
    _
  %s5 = ssub.s32 1, %s3
  %s6 = scalar_select 0, %s5, %s3
  loop: start=0, step=1, limit=4
  $region2: #{cbrblock_forward.3} parent=0 // loop_pre_header
    _
  $region3: #{cbrblock_forward.3} parent=0 // loop_header
    %s8 = sphi 0, %s12
    %p9 = scmp.ge.s32.totalorder %s8, 4
    %s16 = sphi 0, %s16
    %s18 = sphi 0, %s16
    %s19 = sphi 0, %s18
    %s33 = sphi 0, %s19
    %s39 = sphi 0, %s41
    %s42 = sphi 0, %s39
    %s43 = sphi 0, %s42
    %s59 = sphi 0, %s43
    %s65 = sphi 0, %s67
    %s68 = sphi 0, %s65
    %s69 = sphi 0, %s68
    %s85 = sphi 0, %s69
  $region4: #{cbrblock_forward.3} parent=0 // loop_header_branch
    %11 = sbr.rel (%p9) target = $region8
  $region5: #{cbrblock_forward.3} parent=0 // loop_body
    %s13 = ssub.s32 %s8, 1
    %s14 = ssub.s32 %s8, 2
    %s15 = sadd.s32 %s8, 1
    %s17 = sadd.s32 %s16, 1
    %p20 = scmp.eq.s32.totalorder %s8, 1
    %p21 = scmp.ne.s32.totalorder %s16, %s18
    %p22 = scmp.eq.s32.totalorder %s8, 0
    %p23 = por %p21, %p22
    %p24 = scmp.ne.s32.totalorder %s16, %s18
    %p25 = scmp.eq.s32.totalorder %s13, 1
    %p26 = por %p24, %p25
    %p27 = scmp.ne.s32.totalorder %s18, %s19
    %p28 = scmp.eq.s32.totalorder %s13, 0
    %p29 = por %p27, %p28
    %p30 = scmp.ne.s32.totalorder %s18, %s19
    %p31 = scmp.eq.s32.totalorder %s14, 1
    %p32 = por %p30, %p31
    %p34 = scmp.ne.s32.totalorder %s19, %s33
    %p35 = scmp.eq.s32.totalorder %s14, 0
    %p36 = por %p34, %p35
    %s37 = ssub.s32 %s8, %s15
    %p38 = scmp.eq.s32.totalorder %s37, 0
    %s40 = sadd.s32 %s39, 1
    %s41 = scalar_select %p38, %s39, %s40
    %p44 = pneg %p38
    %p45 = scmp.eq.s32.totalorder %s8, 1
    %p46 = por %p44, %p45
    %p47 = scmp.ne.s32.totalorder %s39, %s42
    %p48 = scmp.eq.s32.totalorder %s8, 0
    %p49 = por %p47, %p48
    %p50 = scmp.ne.s32.totalorder %s39, %s42
    %p51 = scmp.eq.s32.totalorder %s13, 1
    %p52 = por %p50, %p51
    %p53 = scmp.ne.s32.totalorder %s42, %s43
    %p54 = scmp.eq.s32.totalorder %s13, 0
    %p55 = por %p53, %p54
    %p56 = scmp.ne.s32.totalorder %s42, %s43
    %p57 = scmp.eq.s32.totalorder %s14, 1
    %p58 = por %p56, %p57
    %p60 = scmp.ne.s32.totalorder %s43, %s59
    %p61 = scmp.eq.s32.totalorder %s14, 0
    %p62 = por %p60, %p61
    %s63 = ssub.s32 %s8, %s15
    %p64 = scmp.eq.s32.totalorder %s63, 0
    %s66 = sadd.s32 %s65, 1
    %s67 = scalar_select %p64, %s65, %s66
    %p70 = pneg %p64
    %p71 = scmp.eq.s32.totalorder %s8, 1
    %p72 = por %p70, %p71
    %p73 = scmp.ne.s32.totalorder %s65, %s68
    %p74 = scmp.eq.s32.totalorder %s8, 0
    %p75 = por %p73, %p74
    %p76 = scmp.ne.s32.totalorder %s65, %s68
    %p77 = scmp.eq.s32.totalorder %s13, 1
    %p78 = por %p76, %p77
    %p79 = scmp.ne.s32.totalorder %s68, %s69
    %p80 = scmp.eq.s32.totalorder %s13, 0
    %p81 = por %p79, %p80
    %p82 = scmp.ne.s32.totalorder %s68, %s69
    %p83 = scmp.eq.s32.totalorder %s14, 1
    %p84 = por %p82, %p83
    %p86 = scmp.ne.s32.totalorder %s69, %s85
    %p87 = scmp.eq.s32.totalorder %s14, 0
    %p88 = por %p86, %p87
    %p89 = scmp.le.s32.totalorder 1, %s8
    %p90 = scmp.lt.s32.totalorder %s8, 3
    %p91 = pnand %p89, %p90
    %p92 = pneg %p91
    // Predicated region
    $region9: #{cbrblock_forward.3} parent=5 // pred_check
      _
    $region10: #{cbrblock_forward.3} parent=5 // pred_check_branch
      %94 = sbr.rel (%p91) target = $region12
    $region11: #{cbrblock_forward.3} parent=5 // pred_region
      %s95 = ssub.s32 %s8, 1
      // Predicated region
      $region13: #{cbrblock_forward.3} parent=11 // pred_check
        %p96 = pneg %p29
      $region14: #{cbrblock_forward.3} parent=11 // pred_check_branch
        %98 = sbr.rel (%p96) target = $region16
      $region15: #{cbrblock_forward.3} parent=11 // pred_region
        _
      $region16: #{cbrblock_forward.3} parent=11 // pred_fallthru
        _
    $region12: #{cbrblock_forward.3} parent=5 // pred_fallthru
      _
    %p99 = scmp.lt.s32.totalorder %s8, 2
    // Predicated region
    $region17: #{cbrblock_forward.3} parent=5 // pred_check
      %p100 = pneg %p99
    $region18: #{cbrblock_forward.3} parent=5 // pred_check_branch
      %102 = sbr.rel (%p100) target = $region20
    $region19: #{cbrblock_forward.3} parent=5 // pred_region
      // Predicated region
      $region21: #{cbrblock_forward.3} parent=19 // pred_check
        %p103 = pneg %p49
      $region22: #{cbrblock_forward.3} parent=19 // pred_check_branch
        %105 = sbr.rel (%p103) target = $region24
      $region23: #{cbrblock_forward.3} parent=19 // pred_region
        %p106 = scmp.lt.s32.totalorder %s8, 1
        %s107 = scalar_select %p106, %s8, 1
        %s108 = smul.addr %s107, 2
        %s109 = smul.addr %s108, 8
        %s110 = scalar_lea.vmem %s1, %s109
      $region24: #{cbrblock_forward.3} parent=19 // pred_fallthru
        _
    $region20: #{cbrblock_forward.3} parent=5 // pred_fallthru
      _
    %p111 = scmp.le.s32.totalorder 1, %s8
    %p112 = scmp.lt.s32.totalorder %s8, 3
    %p113 = pnand %p111, %p112
    %p114 = pneg %p113
    // Predicated region
    $region25: #{cbrblock_forward.3} parent=5 // pred_check
      _
    $region26: #{cbrblock_forward.3} parent=5 // pred_check_branch
      %116 = sbr.rel (%p113) target = $region28
    $region27: #{cbrblock_forward.3} parent=5 // pred_region
      %s117 = ssub.s32 %s8, 1
      %p118 = pneg %p29
      %p119 = pneg %p26
      %p120 = scmp.lt.s32.totalorder %s13, 1
      %s121 = scalar_select %p120, %s13, 1
      %s122 = smul.addr %s121, 2
      %s123 = smul.addr %s122, 8
      %s124 = scalar_lea.vmem %s1, %s123
      %p125 = pneg %p55
      %p126 = pneg %p52
      %p127 = pneg %p81
      %p128 = pneg %p78
      %p129 = scmp.lt.s32.totalorder %s13, 1
      %s130 = scalar_select %p129, %s13, 1
      %s131 = smul.addr %s130, 2
      %s132 = smul.addr %s131, 8
      %s133 = scalar_lea.vmem %s2, %s132
      %p134 = scmp.lt.s32.totalorder %s13, 1
      %s135 = scalar_select %p134, %s13, 1
      %s136 = smul.addr %s135, 2
      %s137 = smul.addr %s136, 8
      %s138 = scalar_lea.vmem %s1, %s137
      %p139 = scmp.lt.s32.totalorder %s13, 1
      %s140 = scalar_select %p139, %s13, 1
      %s141 = smul.addr %s140, 2
      %s142 = smul.addr %s141, 8
      %s143 = scalar_lea.vmem %s2, %s142
      %v144 = vld [vmem:[%s138] sm:$0xff]
      %v145 = vld [vmem:[%s138 + $0x8] sm:$0xff]
      %v146 = vld [vmem:[%s0] sm:$0xff]
      %148 = vset.pattern.permute.xlu0 0
      %149 = vperm.xlu0 %148, %v146
      %v150 = vpop.permute.xlu0 %149
      %v152 = vmul.f32 %v144, %v150
      %v153 = vmul.f32 %v145, %v150
      %154 = vset.pattern.permute.xlu0 1
      %155 = vperm.xlu0 %154, %v146
      %v156 = vpop.permute.xlu0 %155
      %v158 = vadd.f32 %v152, %v156
      %v159 = vadd.f32 %v153, %v156
      %v160 = vmax.f32 %v158, 0.0
      %v161 = vmax.f32 %v159, 0.0
      %162 = vst [vmem:[%s143] sm:$0xff] %v160
      %163 = vst [vmem:[%s143 + $0x8] sm:$0xff] %v161
      %p164 = scmp.lt.s32.totalorder %s13, 1
      %s165 = scalar_select %p164, %s13, 1
      %s166 = smul.addr %s165, 2
      %s167 = smul.addr %s166, 8
      %s168 = scalar_lea.vmem %s2, %s167
      // Predicated region
      $region29: #{cbrblock_forward.3} parent=27 // pred_check
        %p169 = pneg %p78
      $region30: #{cbrblock_forward.3} parent=27 // pred_check_branch
        %171 = sbr.rel (%p169) target = $region32
      $region31: #{cbrblock_forward.3} parent=27 // pred_region
        _
      $region32: #{cbrblock_forward.3} parent=27 // pred_fallthru
        _
    $region28: #{cbrblock_forward.3} parent=5 // pred_fallthru
      _
    %p172 = scmp.le.s32.totalorder 2, %s8
    // Predicated region
    $region33: #{cbrblock_forward.3} parent=5 // pred_check
      %p173 = pneg %p172
    $region34: #{cbrblock_forward.3} parent=5 // pred_check_branch
      %175 = sbr.rel (%p173) target = $region36
    $region35: #{cbrblock_forward.3} parent=5 // pred_region
      %s176 = ssub.s32 %s8, 2
      // Predicated region
      $region37: #{cbrblock_forward.3} parent=35 // pred_check
        %p177 = pneg %p84
      $region38: #{cbrblock_forward.3} parent=35 // pred_check_branch
        %179 = sbr.rel (%p177) target = $region40
      $region39: #{cbrblock_forward.3} parent=35 // pred_region
        %p180 = scmp.lt.s32.totalorder %s14, 1
        %s181 = scalar_select %p180, %s14, 1
        %s182 = smul.addr %s181, 2
        %s183 = smul.addr %s182, 8
        %s184 = scalar_lea.vmem %s2, %s183
      $region40: #{cbrblock_forward.3} parent=35 // pred_fallthru
        _
    $region36: #{cbrblock_forward.3} parent=5 // pred_fallthru
      _
  $region6: #{cbrblock_forward.3} parent=0 // loop_footer
    %s12 = sadd.s32 1, %s8
  $region7: #{cbrblock_forward.3} parent=0 // loop_footer_branch
    %7 = sbr.rel target = $region3
  $region8: #{cbrblock_forward.3} parent=0 // loop_exit
    _

// kernel: cbrblock_forward.2
$region0: #{cbrblock_forward.2}
  #allocation0 [shape = 'u32[]', space=smem, size = 0x4, offset = 0x4, fixed_abs, tag = 'smem constant byte address 0x4 - core index']
  #allocation1 [shape = 'u32[144,128]{1,0:T(1,128)}', space=vmem, size = 0x12000, scoped, tag = 'internal scratch']
  %s0 = inlined_call_operand.vmem [shape: bf16[2,4,18,18], index: 0, kind: input, shape index: {}]
  %s1 = inlined_call_operand.vmem [shape: bf16[9,8,4], index: 1, kind: input, shape index: {}]
  %s2 = inlined_call_operand.vmem [shape: f32[2,8,256], index: 2, kind: output, shape index: {0}]
  %s3 = inlined_call_operand.vmem [shape: f32[2,8,2], index: 3, kind: output, shape index: {1}]
  %4 = xla_tuple %s2, %s3
  %s5 = sld [smem:[#allocation0]]
  $region49: #{cbrblock_forward.2} parent=0
    _
  %s7 = ssub.s32 1, %s5
  %s8 = scalar_select 0, %s7, %s5
  loop: start=0, step=1, limit=4
  $region2: #{cbrblock_forward.2} parent=0 // loop_pre_header
    _
  $region3: #{cbrblock_forward.2} parent=0 // loop_header
    %s10 = sphi 0, %s14
    %p11 = scmp.ge.s32.totalorder %s10, 4
    %s20 = sphi 0, %s22
    %s23 = sphi 0, %s20
    %s24 = sphi 0, %s23
    %s40 = sphi 0, %s24
    %s44 = sphi 0, %s44
    %s46 = sphi 0, %s44
    %s47 = sphi 0, %s46
    %s61 = sphi 0, %s47
    %s67 = sphi 0, %s69
    %s70 = sphi 0, %s67
    %s71 = sphi 0, %s70
    %s87 = sphi 0, %s71
    %s93 = sphi 0, %s95
    %s96 = sphi 0, %s93
    %s97 = sphi 0, %s96
    %s113 = sphi 0, %s97
  $region4: #{cbrblock_forward.2} parent=0 // loop_header_branch
    %13 = sbr.rel (%p11) target = $region8
  $region5: #{cbrblock_forward.2} parent=0 // loop_body
    %s15 = ssub.s32 %s10, 1
    %s16 = ssub.s32 %s10, 2
    %s17 = sadd.s32 %s10, 1
    %s18 = ssub.s32 %s10, %s17
    %p19 = scmp.eq.s32.totalorder %s18, 0
    %s21 = sadd.s32 %s20, 1
    %s22 = scalar_select %p19, %s20, %s21
    %p25 = pneg %p19
    %p26 = scmp.eq.s32.totalorder %s10, 1
    %p27 = por %p25, %p26
    %p28 = scmp.ne.s32.totalorder %s20, %s23
    %p29 = scmp.eq.s32.totalorder %s10, 0
    %p30 = por %p28, %p29
    %p31 = scmp.ne.s32.totalorder %s20, %s23
    %p32 = scmp.eq.s32.totalorder %s15, 1
    %p33 = por %p31, %p32
    %p34 = scmp.ne.s32.totalorder %s23, %s24
    %p35 = scmp.eq.s32.totalorder %s15, 0
    %p36 = por %p34, %p35
    %p37 = scmp.ne.s32.totalorder %s23, %s24
    %p38 = scmp.eq.s32.totalorder %s16, 1
    %p39 = por %p37, %p38
    %p41 = scmp.ne.s32.totalorder %s24, %s40
    %p42 = scmp.eq.s32.totalorder %s16, 0
    %p43 = por %p41, %p42
    %s45 = sadd.s32 %s44, 1
    %p48 = scmp.eq.s32.totalorder %s10, 1
    %p49 = scmp.ne.s32.totalorder %s44, %s46
    %p50 = scmp.eq.s32.totalorder %s10, 0
    %p51 = por %p49, %p50
    %p52 = scmp.ne.s32.totalorder %s44, %s46
    %p53 = scmp.eq.s32.totalorder %s15, 1
    %p54 = por %p52, %p53
    %p55 = scmp.ne.s32.totalorder %s46, %s47
    %p56 = scmp.eq.s32.totalorder %s15, 0
    %p57 = por %p55, %p56
    %p58 = scmp.ne.s32.totalorder %s46, %s47
    %p59 = scmp.eq.s32.totalorder %s16, 1
    %p60 = por %p58, %p59
    %p62 = scmp.ne.s32.totalorder %s47, %s61
    %p63 = scmp.eq.s32.totalorder %s16, 0
    %p64 = por %p62, %p63
    %s65 = ssub.s32 %s10, %s17
    %p66 = scmp.eq.s32.totalorder %s65, 0
    %s68 = sadd.s32 %s67, 1
    %s69 = scalar_select %p66, %s67, %s68
    %p72 = pneg %p66
    %p73 = scmp.eq.s32.totalorder %s10, 1
    %p74 = por %p72, %p73
    %p75 = scmp.ne.s32.totalorder %s67, %s70
    %p76 = scmp.eq.s32.totalorder %s10, 0
    %p77 = por %p75, %p76
    %p78 = scmp.ne.s32.totalorder %s67, %s70
    %p79 = scmp.eq.s32.totalorder %s15, 1
    %p80 = por %p78, %p79
    %p81 = scmp.ne.s32.totalorder %s70, %s71
    %p82 = scmp.eq.s32.totalorder %s15, 0
    %p83 = por %p81, %p82
    %p84 = scmp.ne.s32.totalorder %s70, %s71
    %p85 = scmp.eq.s32.totalorder %s16, 1
    %p86 = por %p84, %p85
    %p88 = scmp.ne.s32.totalorder %s71, %s87
    %p89 = scmp.eq.s32.totalorder %s16, 0
    %p90 = por %p88, %p89
    %s91 = ssub.s32 %s10, %s17
    %p92 = scmp.eq.s32.totalorder %s91, 0
    %s94 = sadd.s32 %s93, 1
    %s95 = scalar_select %p92, %s93, %s94
    %p98 = pneg %p92
    %p99 = scmp.eq.s32.totalorder %s10, 1
    %p100 = por %p98, %p99
    %p101 = scmp.ne.s32.totalorder %s93, %s96
    %p102 = scmp.eq.s32.totalorder %s10, 0
    %p103 = por %p101, %p102
    %p104 = scmp.ne.s32.totalorder %s93, %s96
    %p105 = scmp.eq.s32.totalorder %s15, 1
    %p106 = por %p104, %p105
    %p107 = scmp.ne.s32.totalorder %s96, %s97
    %p108 = scmp.eq.s32.totalorder %s15, 0
    %p109 = por %p107, %p108
    %p110 = scmp.ne.s32.totalorder %s96, %s97
    %p111 = scmp.eq.s32.totalorder %s16, 1
    %p112 = por %p110, %p111
    %p114 = scmp.ne.s32.totalorder %s97, %s113
    %p115 = scmp.eq.s32.totalorder %s16, 0
    %p116 = por %p114, %p115
    %p117 = scmp.le.s32.totalorder 1, %s10
    %p118 = scmp.lt.s32.totalorder %s10, 3
    %p119 = pnand %p117, %p118
    %p120 = pneg %p119
    // Predicated region
    $region9: #{cbrblock_forward.2} parent=5 // pred_check
      _
    $region10: #{cbrblock_forward.2} parent=5 // pred_check_branch
      %122 = sbr.rel (%p119) target = $region12
    $region11: #{cbrblock_forward.2} parent=5 // pred_region
      %s123 = ssub.s32 %s10, 1
      // Predicated region
      $region13: #{cbrblock_forward.2} parent=11 // pred_check
        %p124 = pneg %p57
      $region14: #{cbrblock_forward.2} parent=11 // pred_check_branch
        %126 = sbr.rel (%p124) target = $region16
      $region15: #{cbrblock_forward.2} parent=11 // pred_region
        _
      $region16: #{cbrblock_forward.2} parent=11 // pred_fallthru
        _
    $region12: #{cbrblock_forward.2} parent=5 // pred_fallthru
      _
    %p127 = scmp.lt.s32.totalorder %s10, 2
    // Predicated region
    $region17: #{cbrblock_forward.2} parent=5 // pred_check
      %p128 = pneg %p127
    $region18: #{cbrblock_forward.2} parent=5 // pred_check_branch
      %130 = sbr.rel (%p128) target = $region20
    $region19: #{cbrblock_forward.2} parent=5 // pred_region
      // Predicated region
      $region21: #{cbrblock_forward.2} parent=19 // pred_check
        %p131 = pneg %p30
      $region22: #{cbrblock_forward.2} parent=19 // pred_check_branch
        %133 = sbr.rel (%p131) target = $region24
      $region23: #{cbrblock_forward.2} parent=19 // pred_region
        %p134 = scmp.lt.s32.totalorder %s10, 1
        %s135 = scalar_select %p134, %s10, 1
        %s136 = smul.addr %s135, 12
        %s137 = smul.addr %s136, 4
        %s138 = scalar_lea.vmem %s0, %s137
      $region24: #{cbrblock_forward.2} parent=19 // pred_fallthru
        _
    $region20: #{cbrblock_forward.2} parent=5 // pred_fallthru
      _
    %p139 = scmp.le.s32.totalorder 1, %s10
    %p140 = scmp.lt.s32.totalorder %s10, 3
    %p141 = pnand %p139, %p140
    %p142 = pneg %p141
    // Predicated region
    $region25: #{cbrblock_forward.2} parent=5 // pred_check
      _
    $region26: #{cbrblock_forward.2} parent=5 // pred_check_branch
      %144 = sbr.rel (%p141) target = $region28
    $region27: #{cbrblock_forward.2} parent=5 // pred_region
      %s145 = ssub.s32 %s10, 1
      %p146 = scmp.lt.s32.totalorder %s15, 1
      %s147 = scalar_select %p146, %s15, 1
      %s148 = smul.addr %s147, 12
      %s149 = smul.addr %s148, 4
      %s150 = scalar_lea.vmem %s0, %s149
      %p151 = pneg %p36
      %p152 = pneg %p33
      %p153 = pneg %p57
      %p154 = pneg %p54
      %p155 = pneg %p83
      %p156 = pneg %p80
      %p157 = scmp.lt.s32.totalorder %s15, 1
      %s158 = scalar_select %p157, %s15, 1
      %s159 = smul.addr %s158, 2
      %s160 = smul.addr %s159, 8
      %s161 = scalar_lea.vmem %s2, %s160
      %p162 = pneg %p109
      %p163 = pneg %p106
      %p164 = scmp.lt.s32.totalorder %s15, 1
      %s165 = scalar_select %p164, %s15, 1
      %s166 = smul.addr %s165, 8
      %s167 = scalar_lea.vmem %s3, %s166
      %p168 = scmp.lt.s32.totalorder %s15, 1
      %s169 = scalar_select %p168, %s15, 1
      %s170 = smul.addr %s169, 12
      %s171 = smul.addr %s170, 4
      %s172 = scalar_lea.vmem %s0, %s171
      %p173 = scmp.lt.s32.totalorder %s15, 1
      %s174 = scalar_select %p173, %s15, 1
      %s175 = smul.addr %s174, 2
      %s176 = smul.addr %s175, 8
      %s177 = scalar_lea.vmem %s2, %s176
      %p178 = scmp.lt.s32.totalorder %s15, 1
      %s179 = scalar_select %p178, %s15, 1
      %s180 = smul.addr %s179, 8
      %s181 = scalar_lea.vmem %s3, %s180
      %v183 = vld [vmem:[%s172] sm:$0xf]
      %v184 = vld [vmem:[%s172 + $0x4] sm:$0xf]
      %v185 = vld [vmem:[%s172 + $0x8] sm:$0x1]
      %v186 = vld [vmem:[%s172 + $0xc] sm:$0xf]
      %v187 = vld [vmem:[%s172 + $0x10] sm:$0xf]
      %v188 = vld [vmem:[%s172 + $0x14] sm:$0x1]
      %v189 = vld [vmem:[%s172 + $0x18] sm:$0xf]
      %v190 = vld [vmem:[%s172 + $0x1c] sm:$0xf]
      %v191 = vld [vmem:[%s172 + $0x20] sm:$0x1]
      %v192 = vld [vmem:[%s172 + $0x24] sm:$0xf]
      %v193 = vld [vmem:[%s172 + $0x28] sm:$0xf]
      %v194 = vld [vmem:[%s172 + $0x2c] sm:$0x1]
      %v197 = vpack.i.b16 %v186, %v183
      %v198 = vshrl.u32 %v183, 16
      %v199 = vshrl.u32 %v186, 16
      %v200 = vpack.i.b16 %v199, %v198
      %v203 = vpack.i.b16 %v192, %v189
      %v204 = vshrl.u32 %v189, 16
      %v205 = vshrl.u32 %v192, 16
      %v206 = vpack.i.b16 %v205, %v204
      %v209 = vpack.i.b16 %v187, %v184
      %v210 = vshrl.u32 %v184, 16
      %v211 = vshrl.u32 %v187, 16
      %v212 = vpack.i.b16 %v211, %v210
      %v215 = vpack.i.b16 %v193, %v190
      %v216 = vshrl.u32 %v190, 16
      %v217 = vshrl.u32 %v193, 16
      %v218 = vpack.i.b16 %v217, %v216
      %v221 = vunpack.c.l.s4 1983009808
      %v222 = vunpack.c.0.s8 %v221
      %v223 = vlaneseq
      %v224 = vshrl.u32 %v223, 7
      %v225 = vsub.s32 %v222, %v224
      %v226 = vrot.slane %v197, %v225
      %v229 = vunpack.c.l.s4 1983009808
      %v230 = vunpack.c.0.s8 %v229
      %v231 = vlaneseq
      %v232 = vshrl.u32 %v231, 7
      %v233 = vsub.s32 %v230, %v232
      %v234 = vrot.slane %v203, %v233
      %v235 = vcombine.low %v226, %v234
      %v236 = vcombine.high %v226, %v234
      %v238 = vunpack.c.l.s4 1934713408
      %v239 = vunpack.c.0.s8 %v238
      %v240 = vlaneseq
      %v241 = vshrl.u32 %v240, 7
      %v242 = vsub.s32 %v239, %v241
      %v243 = vrot.slane %v235, %v242
      %v245 = vunpack.c.l.s4 1934713408
      %v246 = vunpack.c.0.s8 %v245
      %v247 = vlaneseq
      %v248 = vshrl.u32 %v247, 7
      %v249 = vsub.s32 %v246, %v248
      %v250 = vrot.slane %v236, %v249
      %v251 = vcombine.high %v243, 0
      %v252 = vcombine.high %v250, 0
      %v255 = vunpack.c.l.s4 1983009808
      %v256 = vunpack.c.0.s8 %v255
      %v257 = vlaneseq
      %v258 = vshrl.u32 %v257, 7
      %v259 = vsub.s32 %v256, %v258
      %v260 = vrot.slane %v200, %v259
      %v263 = vunpack.c.l.s4 1983009808
      %v264 = vunpack.c.0.s8 %v263
      %v265 = vlaneseq
      %v266 = vshrl.u32 %v265, 7
      %v267 = vsub.s32 %v264, %v266
      %v268 = vrot.slane %v206, %v267
      %v269 = vcombine.low %v260, %v268
      %v270 = vcombine.high %v260, %v268
      %v272 = vunpack.c.l.s4 1934713408
      %v273 = vunpack.c.0.s8 %v272
      %v274 = vlaneseq
      %v275 = vshrl.u32 %v274, 7
      %v276 = vsub.s32 %v273, %v275
      %v277 = vrot.slane %v269, %v276
      %v279 = vunpack.c.l.s4 1934713408
      %v280 = vunpack.c.0.s8 %v279
      %v281 = vlaneseq
      %v282 = vshrl.u32 %v281, 7
      %v283 = vsub.s32 %v280, %v282
      %v284 = vrot.slane %v270, %v283
      %v285 = vcombine.high %v277, 0
      %v286 = vcombine.high %v284, 0
      %v289 = vunpack.c.l.s4 1983009808
      %v290 = vunpack.c.0.s8 %v289
      %v291 = vlaneseq
      %v292 = vshrl.u32 %v291, 7
      %v293 = vsub.s32 %v290, %v292
      %v294 = vrot.slane %v209, %v293
      %v297 = vunpack.c.l.s4 1983009808
      %v298 = vunpack.c.0.s8 %v297
      %v299 = vlaneseq
      %v300 = vshrl.u32 %v299, 7
      %v301 = vsub.s32 %v298, %v300
      %v302 = vrot.slane %v215, %v301
      %v303 = vcombine.low %v294, %v302
      %v304 = vcombine.high %v294, %v302
      %v306 = vunpack.c.l.s4 1934713408
      %v307 = vunpack.c.0.s8 %v306
      %v308 = vlaneseq
      %v309 = vshrl.u32 %v308, 7
      %v310 = vsub.s32 %v307, %v309
      %v311 = vrot.slane %v303, %v310
      %v313 = vunpack.c.l.s4 1934713408
      %v314 = vunpack.c.0.s8 %v313
      %v315 = vlaneseq
      %v316 = vshrl.u32 %v315, 7
      %v317 = vsub.s32 %v314, %v316
      %v318 = vrot.slane %v304, %v317
      %v319 = vcombine.high %v311, 0
      %v320 = vcombine.high %v318, 0
      %v323 = vunpack.c.l.s4 1983009808
      %v324 = vunpack.c.0.s8 %v323
      %v325 = vlaneseq
      %v326 = vshrl.u32 %v325, 7
      %v327 = vsub.s32 %v324, %v326
      %v328 = vrot.slane %v212, %v327
      %v331 = vunpack.c.l.s4 1983009808
      %v332 = vunpack.c.0.s8 %v331
      %v333 = vlaneseq
      %v334 = vshrl.u32 %v333, 7
      %v335 = vsub.s32 %v332, %v334
      %v336 = vrot.slane %v218, %v335
      %v337 = vcombine.low %v328, %v336
      %v338 = vcombine.high %v328, %v336
      %v340 = vunpack.c.l.s4 1934713408
      %v341 = vunpack.c.0.s8 %v340
      %v342 = vlaneseq
      %v343 = vshrl.u32 %v342, 7
      %v344 = vsub.s32 %v341, %v343
      %v345 = vrot.slane %v337, %v344
      %v347 = vunpack.c.l.s4 1934713408
      %v348 = vunpack.c.0.s8 %v347
      %v349 = vlaneseq
      %v350 = vshrl.u32 %v349, 7
      %v351 = vsub.s32 %v348, %v350
      %v352 = vrot.slane %v338, %v351
      %v353 = vcombine.high %v345, 0
      %v354 = vcombine.high %v352, 0
      %v356 = vunpack.c.l.b16 %v277
      %v357 = vpack.c.b16 %v356, %v356
      %358 = vrot.lane.b32.xlu0 %v357, 16
      %v359 = vpop.permute.xlu0 %358
      %v361 = vunpack.c.l.b16 %v251
      %v362 = vpack.c.b16 %v361, %v361
      %363 = vrot.lane.b32.xlu0 %v362, 32
      %v364 = vpop.permute.xlu0 %363
      %v366 = vunpack.c.l.b16 %v285
      %v367 = vpack.c.b16 %v366, %v366
      %368 = vrot.lane.b32.xlu0 %v367, 48
      %v369 = vpop.permute.xlu0 %368
      %v371 = vunpack.c.l.b16 %v250
      %v372 = vpack.c.b16 %v371, %v371
      %373 = vrot.lane.b32.xlu0 %v372, 64
      %v374 = vpop.permute.xlu0 %373
      %v376 = vunpack.c.l.b16 %v284
      %v377 = vpack.c.b16 %v376, %v376
      %378 = vrot.lane.b32.xlu0 %v377, 80
      %v379 = vpop.permute.xlu0 %378
      %v381 = vunpack.c.l.b16 %v252
      %v382 = vpack.c.b16 %v381, %v381
      %383 = vrot.lane.b32.xlu0 %v382, 96
      %v384 = vpop.permute.xlu0 %383
      %v386 = vunpack.c.l.b16 %v286
      %v387 = vpack.c.b16 %v386, %v386
      %388 = vrot.lane.b32.xlu0 %v387, 112
      %v389 = vpop.permute.xlu0 %388
      %v391 = vunpack.c.l.b16 %v345
      %v392 = vpack.c.b16 %v391, %v391
      %393 = vrot.lane.b32.xlu0 %v392, 16
      %v394 = vpop.permute.xlu0 %393
      %v396 = vunpack.c.l.b16 %v319
      %v397 = vpack.c.b16 %v396, %v396
      %398 = vrot.lane.b32.xlu0 %v397, 32
      %v399 = vpop.permute.xlu0 %398
      %v401 = vunpack.c.l.b16 %v353
      %v402 = vpack.c.b16 %v401, %v401
      %403 = vrot.lane.b32.xlu0 %v402, 48
      %v404 = vpop.permute.xlu0 %403
      %v406 = vunpack.c.l.b16 %v318
      %v407 = vpack.c.b16 %v406, %v406
      %408 = vrot.lane.b32.xlu0 %v407, 64
      %v409 = vpop.permute.xlu0 %408
      %v411 = vunpack.c.l.b16 %v352
      %v412 = vpack.c.b16 %v411, %v411
      %413 = vrot.lane.b32.xlu0 %v412, 80
      %v414 = vpop.permute.xlu0 %413
      %v416 = vunpack.c.l.b16 %v320
      %v417 = vpack.c.b16 %v416, %v416
      %418 = vrot.lane.b32.xlu0 %v417, 96
      %v419 = vpop.permute.xlu0 %418
      %v421 = vunpack.c.l.b16 %v354
      %v422 = vpack.c.b16 %v421, %v421
      %423 = vrot.lane.b32.xlu0 %v422, 112
      %v424 = vpop.permute.xlu0 %423
      %vm425 = vcmask 130048
      %v428 = vsel %vm425, %v243, %v359
      %vm429 = vcmask 261120
      %v431 = vsel %vm429, %v428, %v364
      %vm432 = vcmask 392192
      %v434 = vsel %vm432, %v431, %v369
      %vm435 = vcmask 523264
      %v437 = vsel %vm435, %v434, %v374
      %vm438 = vcmask 654336
      %v440 = vsel %vm438, %v437, %v379
      %vm441 = vcmask 785408
      %v443 = vsel %vm441, %v440, %v384
      %vm444 = vcmask 916480
      %v446 = vsel %vm444, %v443, %v389
      %v449 = vsel %vm425, %v311, %v394
      %v451 = vsel %vm429, %v449, %v399
      %v453 = vsel %vm432, %v451, %v404
      %v455 = vsel %vm435, %v453, %v409
      %v457 = vsel %vm438, %v455, %v414
      %v459 = vsel %vm441, %v457, %v419
      %v461 = vsel %vm444, %v459, %v424
      %v462 = vld [vmem:[%s1] sm:$0xf]
      %471 = vrot.lane.b32.xlu0 %v183, 127
      %v472 = vpop.permute.xlu0 %471
      %473 = vrot.lane.b32.xlu0 %v184, 127
      %v474 = vpop.permute.xlu0 %473
      %475 = vrot.lane.b32.xlu0 %v186, 127
      %v476 = vpop.permute.xlu0 %475
      %477 = vrot.lane.b32.xlu0 %v187, 127
      %v478 = vpop.permute.xlu0 %477
      %479 = vrot.lane.b32.xlu0 %v189, 127
      %v480 = vpop.permute.xlu0 %479
      %481 = vrot.lane.b32.xlu0 %v190, 127
      %v482 = vpop.permute.xlu0 %481
      %483 = vrot.lane.b32.xlu0 %v192, 127
      %v484 = vpop.permute.xlu0 %483
      %485 = vrot.lane.b32.xlu0 %v193, 127
      %v486 = vpop.permute.xlu0 %485
      %v489 = vpack.i.b16 %v476, %v472
      %v490 = vshrl.u32 %v472, 16
      %v491 = vshrl.u32 %v476, 16
      %v492 = vpack.i.b16 %v491, %v490
      %v495 = vpack.i.b16 %v484, %v480
      %v496 = vshrl.u32 %v480, 16
      %v497 = vshrl.u32 %v484, 16
      %v498 = vpack.i.b16 %v497, %v496
      %v501 = vpack.i.b16 %v478, %v474
      %v502 = vshrl.u32 %v474, 16
      %v503 = vshrl.u32 %v478, 16
      %v504 = vpack.i.b16 %v503, %v502
      %v507 = vpack.i.b16 %v486, %v482
      %v508 = vshrl.u32 %v482, 16
      %v509 = vshrl.u32 %v486, 16
      %v510 = vpack.i.b16 %v509, %v508
      %v513 = vunpack.c.l.s4 1983009808
      %v514 = vunpack.c.0.s8 %v513
      %v515 = vlaneseq
      %v516 = vshrl.u32 %v515, 7
      %v517 = vsub.s32 %v514, %v516
      %v518 = vrot.slane %v489, %v517
      %v521 = vunpack.c.l.s4 1983009808
      %v522 = vunpack.c.0.s8 %v521
      %v523 = vlaneseq
      %v524 = vshrl.u32 %v523, 7
      %v525 = vsub.s32 %v522, %v524
      %v526 = vrot.slane %v495, %v525
      %v527 = vcombine.low %v518, %v526
      %v528 = vcombine.high %v518, %v526
      %v530 = vunpack.c.l.s4 1934713408
      %v531 = vunpack.c.0.s8 %v530
      %v532 = vlaneseq
      %v533 = vshrl.u32 %v532, 7
      %v534 = vsub.s32 %v531, %v533
      %v535 = vrot.slane %v527, %v534
      %v537 = vunpack.c.l.s4 1934713408
      %v538 = vunpack.c.0.s8 %v537
      %v539 = vlaneseq
      %v540 = vshrl.u32 %v539, 7
      %v541 = vsub.s32 %v538, %v540
      %v542 = vrot.slane %v528, %v541
      %v543 = vcombine.high %v535, 0
      %v544 = vcombine.high %v542, 0
      %v547 = vunpack.c.l.s4 1983009808
      %v548 = vunpack.c.0.s8 %v547
      %v549 = vlaneseq
      %v550 = vshrl.u32 %v549, 7
      %v551 = vsub.s32 %v548, %v550
      %v552 = vrot.slane %v492, %v551
      %v555 = vunpack.c.l.s4 1983009808
      %v556 = vunpack.c.0.s8 %v555
      %v557 = vlaneseq
      %v558 = vshrl.u32 %v557, 7
      %v559 = vsub.s32 %v556, %v558
      %v560 = vrot.slane %v498, %v559
      %v561 = vcombine.low %v552, %v560
      %v562 = vcombine.high %v552, %v560
      %v564 = vunpack.c.l.s4 1934713408
      %v565 = vunpack.c.0.s8 %v564
      %v566 = vlaneseq
      %v567 = vshrl.u32 %v566, 7
      %v568 = vsub.s32 %v565, %v567
      %v569 = vrot.slane %v561, %v568
      %v571 = vunpack.c.l.s4 1934713408
      %v572 = vunpack.c.0.s8 %v571
      %v573 = vlaneseq
      %v574 = vshrl.u32 %v573, 7
      %v575 = vsub.s32 %v572, %v574
      %v576 = vrot.slane %v562, %v575
      %v577 = vcombine.high %v569, 0
      %v578 = vcombine.high %v576, 0
      %v581 = vunpack.c.l.s4 1983009808
      %v582 = vunpack.c.0.s8 %v581
      %v583 = vlaneseq
      %v584 = vshrl.u32 %v583, 7
      %v585 = vsub.s32 %v582, %v584
      %v586 = vrot.slane %v501, %v585
      %v589 = vunpack.c.l.s4 1983009808
      %v590 = vunpack.c.0.s8 %v589
      %v591 = vlaneseq
      %v592 = vshrl.u32 %v591, 7
      %v593 = vsub.s32 %v590, %v592
      %v594 = vrot.slane %v507, %v593
      %v595 = vcombine.low %v586, %v594
      %v596 = vcombine.high %v586, %v594
      %v598 = vunpack.c.l.s4 1934713408
      %v599 = vunpack.c.0.s8 %v598
      %v600 = vlaneseq
      %v601 = vshrl.u32 %v600, 7
      %v602 = vsub.s32 %v599, %v601
      %v603 = vrot.slane %v595, %v602
      %v605 = vunpack.c.l.s4 1934713408
      %v606 = vunpack.c.0.s8 %v605
      %v607 = vlaneseq
      %v608 = vshrl.u32 %v607, 7
      %v609 = vsub.s32 %v606, %v608
      %v610 = vrot.slane %v596, %v609
      %v611 = vcombine.high %v603, 0
      %v612 = vcombine.high %v610, 0
      %v615 = vunpack.c.l.s4 1983009808
      %v616 = vunpack.c.0.s8 %v615
      %v617 = vlaneseq
      %v618 = vshrl.u32 %v617, 7
      %v619 = vsub.s32 %v616, %v618
      %v620 = vrot.slane %v504, %v619
      %v623 = vunpack.c.l.s4 1983009808
      %v624 = vunpack.c.0.s8 %v623
      %v625 = vlaneseq
      %v626 = vshrl.u32 %v625, 7
      %v627 = vsub.s32 %v624, %v626
      %v628 = vrot.slane %v510, %v627
      %v629 = vcombine.low %v620, %v628
      %v630 = vcombine.high %v620, %v628
      %v632 = vunpack.c.l.s4 1934713408
      %v633 = vunpack.c.0.s8 %v632
      %v634 = vlaneseq
      %v635 = vshrl.u32 %v634, 7
      %v636 = vsub.s32 %v633, %v635
      %v637 = vrot.slane %v629, %v636
      %v639 = vunpack.c.l.s4 1934713408
      %v640 = vunpack.c.0.s8 %v639
      %v641 = vlaneseq
      %v642 = vshrl.u32 %v641, 7
      %v643 = vsub.s32 %v640, %v642
      %v644 = vrot.slane %v630, %v643
      %v645 = vcombine.high %v637, 0
      %v646 = vcombine.high %v644, 0
      %v648 = vunpack.c.l.b16 %v569
      %v649 = vpack.c.b16 %v648, %v648
      %650 = vrot.lane.b32.xlu0 %v649, 16
      %v651 = vpop.permute.xlu0 %650
      %v653 = vunpack.c.l.b16 %v543
      %v654 = vpack.c.b16 %v653, %v653
      %655 = vrot.lane.b32.xlu0 %v654, 32
      %v656 = vpop.permute.xlu0 %655
      %v658 = vunpack.c.l.b16 %v577
      %v659 = vpack.c.b16 %v658, %v658
      %660 = vrot.lane.b32.xlu0 %v659, 48
      %v661 = vpop.permute.xlu0 %660
      %v663 = vunpack.c.l.b16 %v542
      %v664 = vpack.c.b16 %v663, %v663
      %665 = vrot.lane.b32.xlu0 %v664, 64
      %v666 = vpop.permute.xlu0 %665
      %v668 = vunpack.c.l.b16 %v576
      %v669 = vpack.c.b16 %v668, %v668
      %670 = vrot.lane.b32.xlu0 %v669, 80
      %v671 = vpop.permute.xlu0 %670
      %v673 = vunpack.c.l.b16 %v544
      %v674 = vpack.c.b16 %v673, %v673
      %675 = vrot.lane.b32.xlu0 %v674, 96
      %v676 = vpop.permute.xlu0 %675
      %v678 = vunpack.c.l.b16 %v578
      %v679 = vpack.c.b16 %v678, %v678
      %680 = vrot.lane.b32.xlu0 %v679, 112
      %v681 = vpop.permute.xlu0 %680
      %v683 = vunpack.c.l.b16 %v637
      %v684 = vpack.c.b16 %v683, %v683
      %685 = vrot.lane.b32.xlu0 %v684, 16
      %v686 = vpop.permute.xlu0 %685
      %v688 = vunpack.c.l.b16 %v611
      %v689 = vpack.c.b16 %v688, %v688
      %690 = vrot.lane.b32.xlu0 %v689, 32
      %v691 = vpop.permute.xlu0 %690
      %v693 = vunpack.c.l.b16 %v645
      %v694 = vpack.c.b16 %v693, %v693
      %695 = vrot.lane.b32.xlu0 %v694, 48
      %v696 = vpop.permute.xlu0 %695
      %v698 = vunpack.c.l.b16 %v610
      %v699 = vpack.c.b16 %v698, %v698
      %700 = vrot.lane.b32.xlu0 %v699, 64
      %v701 = vpop.permute.xlu0 %700
      %v703 = vunpack.c.l.b16 %v644
      %v704 = vpack.c.b16 %v703, %v703
      %705 = vrot.lane.b32.xlu0 %v704, 80
      %v706 = vpop.permute.xlu0 %705
      %v708 = vunpack.c.l.b16 %v612
      %v709 = vpack.c.b16 %v708, %v708
      %710 = vrot.lane.b32.xlu0 %v709, 96
      %v711 = vpop.permute.xlu0 %710
      %v713 = vunpack.c.l.b16 %v646
      %v714 = vpack.c.b16 %v713, %v713
      %715 = vrot.lane.b32.xlu0 %v714, 112
      %v716 = vpop.permute.xlu0 %715
      %v719 = vsel %vm425, %v535, %v651
      %v721 = vsel %vm429, %v719, %v656
      %v723 = vsel %vm432, %v721, %v661
      %v725 = vsel %vm435, %v723, %v666
      %v727 = vsel %vm438, %v725, %v671
      %v729 = vsel %vm441, %v727, %v676
      %v731 = vsel %vm444, %v729, %v681
      %v734 = vsel %vm425, %v603, %v686
      %v736 = vsel %vm429, %v734, %v691
      %v738 = vsel %vm432, %v736, %v696
      %v740 = vsel %vm435, %v738, %v701
      %v742 = vsel %vm438, %v740, %v706
      %v744 = vsel %vm441, %v742, %v711
      %v746 = vsel %vm444, %v744, %v716
      %s747 = scalar_lea.vmem %s1, 4
      %v748 = vld [vmem:[%s747] sm:$0xf]
      %vm749 = vcmask 31744
      %v751 = vsel %vm749, %v748, 0
      %vm753 = vcmask 1041408
      %v754 = vsel %vm753, %v731, 0
      %v756 = vsel %vm753, %v746, 0
      %758 = vmatprep.subr.bf16.mxu0 0
      %759 = vmatpush1.bf16.msra.mxu0 0
      %760 = vmatprep.subr.bf16.mxu0 0
      %761 = vmatpush1.bf16.msra.mxu0 0
      %762 = vmatprep.subr.bf16.mxu0 0
      %763 = vmatpush1.bf16.msra.mxu0 0
      %764 = vmatprep.subr.bf16.mxu0 0
      %765 = vmatpush1.bf16.msra.mxu0 0
      %766 = vmatprep.subr.bf16.mxu0 0
      %767 = vmatpush1.bf16.msra.mxu0 0
      %768 = vmatprep.subr.bf16.mxu0 0
      %769 = vmatpush1.bf16.msra.mxu0 0
      %770 = vmatprep.subr.bf16.mxu0 0
      %771 = vmatpush1.bf16.msra.mxu0 0
      %772 = vmatprep.subr.bf16.mxu0 %v756
      %773 = vmatpush1.bf16.msra.mxu0 %v754
      %774 = vmatprep.subr.bf16.mxu0 0
      %775 = vmatpush2.bf16.msra.mxu0 0
      %776 = vmatprep.subr.bf16.mxu0 0
      %777 = vmatpush2.bf16.msra.mxu0 0
      %778 = vmatprep.subr.bf16.mxu0 0
      %779 = vmatpush2.bf16.msra.mxu0 0
      %780 = vmatprep.subr.bf16.mxu0 0
      %781 = vmatpush2.bf16.msra.mxu0 0
      %782 = vmatprep.subr.bf16.mxu0 0
      %783 = vmatpush2.bf16.msra.mxu0 0
      %784 = vmatprep.subr.bf16.mxu0 0
      %785 = vmatpush2.bf16.msra.mxu0 0
      %786 = vmatprep.subr.bf16.mxu0 0
      %787 = vmatpush2.bf16.msra.mxu0 0
      %788 = vmatprep.subr.bf16.mxu0 0
      %789 = vmatpush2.bf16.msra.mxu0 0
      %790 = vmatprep.mubr.bf16.mxu0 0
      %791 = vmatmul.mubr.bf16.gmra.mxu0 %v751
      %v792 = vpop.f32.mrf.mxu0
      %v793 = vadd.f32 0.0, %v792
      %v794 = vpop.f32.mrf.mxu0
      %v795 = vadd.f32 0.0, %v794
      %v796 = vpop.f32.mrf.mxu0
      %v797 = vpop.f32.mrf.mxu0
      %798 = vdwg.mxu0
      %v800 = vsel %vm749, %v462, 0
      %v802 = vsel %vm753, %v446, 0
      %v804 = vsel %vm753, %v461, 0
      %806 = vmatprep.subr.bf16.mxu0 0
      %807 = vmatpush1.bf16.msra.mxu0 0
      %808 = vmatprep.subr.bf16.mxu0 0
      %809 = vmatpush1.bf16.msra.mxu0 0
      %810 = vmatprep.subr.bf16.mxu0 0
      %811 = vmatpush1.bf16.msra.mxu0 0
      %812 = vmatprep.subr.bf16.mxu0 0
      %813 = vmatpush1.bf16.msra.mxu0 0
      %814 = vmatprep.subr.bf16.mxu0 0
      %815 = vmatpush1.bf16.msra.mxu0 0
      %816 = vmatprep.subr.bf16.mxu0 0
      %817 = vmatpush1.bf16.msra.mxu0 0
      %818 = vmatprep.subr.bf16.mxu0 0
      %819 = vmatpush1.bf16.msra.mxu0 0
      %820 = vmatprep.subr.bf16.mxu0 %v804
      %821 = vmatpush1.bf16.msra.mxu0 %v802
      %822 = vmatprep.subr.bf16.mxu0 0
      %823 = vmatpush2.bf16.msra.mxu0 0
      %824 = vmatprep.subr.bf16.mxu0 0
      %825 = vmatpush2.bf16.msra.mxu0 0
      %826 = vmatprep.subr.bf16.mxu0 0
      %827 = vmatpush2.bf16.msra.mxu0 0
      %828 = vmatprep.subr.bf16.mxu0 0
      %829 = vmatpush2.bf16.msra.mxu0 0
      %830 = vmatprep.subr.bf16.mxu0 0
      %831 = vmatpush2.bf16.msra.mxu0 0
      %832 = vmatprep.subr.bf16.mxu0 0
      %833 = vmatpush2.bf16.msra.mxu0 0
      %834 = vmatprep.subr.bf16.mxu0 0
      %835 = vmatpush2.bf16.msra.mxu0 0
      %836 = vmatprep.subr.bf16.mxu0 0
      %837 = vmatpush2.bf16.msra.mxu0 0
      %838 = vmatprep.mubr.bf16.mxu0 0
      %839 = vmatmul.mubr.bf16.gmra.mxu0 %v800
      %v840 = vpop.f32.mrf.mxu0
      %v841 = vadd.f32 %v793, %v840
      %v842 = vpop.f32.mrf.mxu0
      %v843 = vadd.f32 %v795, %v842
      %v844 = vpop.f32.mrf.mxu0
      %v845 = vpop.f32.mrf.mxu0
      %846 = vdwg.mxu0
      %847 = vrot.lane.b32.xlu0 %v183, 126
      %v848 = vpop.permute.xlu0 %847
      %849 = vrot.lane.b32.xlu0 %v184, 126
      %v850 = vpop.permute.xlu0 %849
      %851 = vrot.lane.b32.xlu0 %v186, 126
      %v852 = vpop.permute.xlu0 %851
      %853 = vrot.lane.b32.xlu0 %v187, 126
      %v854 = vpop.permute.xlu0 %853
      %855 = vrot.lane.b32.xlu0 %v189, 126
      %v856 = vpop.permute.xlu0 %855
      %857 = vrot.lane.b32.xlu0 %v190, 126
      %v858 = vpop.permute.xlu0 %857
      %859 = vrot.lane.b32.xlu0 %v192, 126
      %v860 = vpop.permute.xlu0 %859
      %861 = vrot.lane.b32.xlu0 %v193, 126
      %v862 = vpop.permute.xlu0 %861
      %v865 = vpack.i.b16 %v852, %v848
      %v866 = vshrl.u32 %v848, 16
      %v867 = vshrl.u32 %v852, 16
      %v868 = vpack.i.b16 %v867, %v866
      %v871 = vpack.i.b16 %v860, %v856
      %v872 = vshrl.u32 %v856, 16
      %v873 = vshrl.u32 %v860, 16
      %v874 = vpack.i.b16 %v873, %v872
      %v877 = vpack.i.b16 %v854, %v850
      %v878 = vshrl.u32 %v850, 16
      %v879 = vshrl.u32 %v854, 16
      %v880 = vpack.i.b16 %v879, %v878
      %v883 = vpack.i.b16 %v862, %v858
      %v884 = vshrl.u32 %v858, 16
      %v885 = vshrl.u32 %v862, 16
      %v886 = vpack.i.b16 %v885, %v884
      %v889 = vunpack.c.l.s4 1983009808
      %v890 = vunpack.c.0.s8 %v889
      %v891 = vlaneseq
      %v892 = vshrl.u32 %v891, 7
      %v893 = vsub.s32 %v890, %v892
      %v894 = vrot.slane %v865, %v893
      %v897 = vunpack.c.l.s4 1983009808
      %v898 = vunpack.c.0.s8 %v897
      %v899 = vlaneseq
      %v900 = vshrl.u32 %v899, 7
      %v901 = vsub.s32 %v898, %v900
      %v902 = vrot.slane %v871, %v901
      %v903 = vcombine.low %v894, %v902
      %v904 = vcombine.high %v894, %v902
      %v906 = vunpack.c.l.s4 1934713408
      %v907 = vunpack.c.0.s8 %v906
      %v908 = vlaneseq
      %v909 = vshrl.u32 %v908, 7
      %v910 = vsub.s32 %v907, %v909
      %v911 = vrot.slane %v903, %v910
      %v913 = vunpack.c.l.s4 1934713408
      %v914 = vunpack.c.0.s8 %v913
      %v915 = vlaneseq
      %v916 = vshrl.u32 %v915, 7
      %v917 = vsub.s32 %v914, %v916
      %v918 = vrot.slane %v904, %v917
      %v919 = vcombine.high %v911, 0
      %v920 = vcombine.high %v918, 0
      %v923 = vunpack.c.l.s4 1983009808
      %v924 = vunpack.c.0.s8 %v923
      %v925 = vlaneseq
      %v926 = vshrl.u32 %v925, 7
      %v927 = vsub.s32 %v924, %v926
      %v928 = vrot.slane %v868, %v927
      %v931 = vunpack.c.l.s4 1983009808
      %v932 = vunpack.c.0.s8 %v931
      %v933 = vlaneseq
      %v934 = vshrl.u32 %v933, 7
      %v935 = vsub.s32 %v932, %v934
      %v936 = vrot.slane %v874, %v935
      %v937 = vcombine.low %v928, %v936
      %v938 = vcombine.high %v928, %v936
      %v940 = vunpack.c.l.s4 1934713408
      %v941 = vunpack.c.0.s8 %v940
      %v942 = vlaneseq
      %v943 = vshrl.u32 %v942, 7
      %v944 = vsub.s32 %v941, %v943
      %v945 = vrot.slane %v937, %v944
      %v947 = vunpack.c.l.s4 1934713408
      %v948 = vunpack.c.0.s8 %v947
      %v949 = vlaneseq
      %v950 = vshrl.u32 %v949, 7
      %v951 = vsub.s32 %v948, %v950
      %v952 = vrot.slane %v938, %v951
      %v953 = vcombine.high %v945, 0
      %v954 = vcombine.high %v952, 0
      %v957 = vunpack.c.l.s4 1983009808
      %v958 = vunpack.c.0.s8 %v957
      %v959 = vlaneseq
      %v960 = vshrl.u32 %v959, 7
      %v961 = vsub.s32 %v958, %v960
      %v962 = vrot.slane %v877, %v961
      %v965 = vunpack.c.l.s4 1983009808
      %v966 = vunpack.c.0.s8 %v965
      %v967 = vlaneseq
      %v968 = vshrl.u32 %v967, 7
      %v969 = vsub.s32 %v966, %v968
      %v970 = vrot.slane %v883, %v969
      %v971 = vcombine.low %v962, %v970
      %v972 = vcombine.high %v962, %v970
      %v974 = vunpack.c.l.s4 1934713408
      %v975 = vunpack.c.0.s8 %v974
      %v976 = vlaneseq
      %v977 = vshrl.u32 %v976, 7
      %v978 = vsub.s32 %v975, %v977
      %v979 = vrot.slane %v971, %v978
      %v981 = vunpack.c.l.s4 1934713408
      %v982 = vunpack.c.0.s8 %v981
      %v983 = vlaneseq
      %v984 = vshrl.u32 %v983, 7
      %v985 = vsub.s32 %v982, %v984
      %v986 = vrot.slane %v972, %v985
      %v987 = vcombine.high %v979, 0
      %v988 = vcombine.high %v986, 0
      %v991 = vunpack.c.l.s4 1983009808
      %v992 = vunpack.c.0.s8 %v991
      %v993 = vlaneseq
      %v994 = vshrl.u32 %v993, 7
      %v995 = vsub.s32 %v992, %v994
      %v996 = vrot.slane %v880, %v995
      %v999 = vunpack.c.l.s4 1983009808
      %v1000 = vunpack.c.0.s8 %v999
      %v1001 = vlaneseq
      %v1002 = vshrl.u32 %v1001, 7
      %v1003 = vsub.s32 %v1000, %v1002
      %v1004 = vrot.slane %v886, %v1003
      %v1005 = vcombine.low %v996, %v1004
      %v1006 = vcombine.high %v996, %v1004
      %v1008 = vunpack.c.l.s4 1934713408
      %v1009 = vunpack.c.0.s8 %v1008
      %v1010 = vlaneseq
      %v1011 = vshrl.u32 %v1010, 7
      %v1012 = vsub.s32 %v1009, %v1011
      %v1013 = vrot.slane %v1005, %v1012
      %v1015 = vunpack.c.l.s4 1934713408
      %v1016 = vunpack.c.0.s8 %v1015
      %v1017 = vlaneseq
      %v1018 = vshrl.u32 %v1017, 7
      %v1019 = vsub.s32 %v1016, %v1018
      %v1020 = vrot.slane %v1006, %v1019
      %v1021 = vcombine.high %v1013, 0
      %v1022 = vcombine.high %v1020, 0
      %v1024 = vunpack.c.l.b16 %v945
      %v1025 = vpack.c.b16 %v1024, %v1024
      %1026 = vrot.lane.b32.xlu0 %v1025, 16
      %v1027 = vpop.permute.xlu0 %1026
      %v1029 = vunpack.c.l.b16 %v919
      %v1030 = vpack.c.b16 %v1029, %v1029
      %1031 = vrot.lane.b32.xlu0 %v1030, 32
      %v1032 = vpop.permute.xlu0 %1031
      %v1034 = vunpack.c.l.b16 %v953
      %v1035 = vpack.c.b16 %v1034, %v1034
      %1036 = vrot.lane.b32.xlu0 %v1035, 48
      %v1037 = vpop.permute.xlu0 %1036
      %v1039 = vunpack.c.l.b16 %v918
      %v1040 = vpack.c.b16 %v1039, %v1039
      %1041 = vrot.lane.b32.xlu0 %v1040, 64
      %v1042 = vpop.permute.xlu0 %1041
      %v1044 = vunpack.c.l.b16 %v952
      %v1045 = vpack.c.b16 %v1044, %v1044
      %1046 = vrot.lane.b32.xlu0 %v1045, 80
      %v1047 = vpop.permute.xlu0 %1046
      %v1049 = vunpack.c.l.b16 %v920
      %v1050 = vpack.c.b16 %v1049, %v1049
      %1051 = vrot.lane.b32.xlu0 %v1050, 96
      %v1052 = vpop.permute.xlu0 %1051
      %v1054 = vunpack.c.l.b16 %v954
      %v1055 = vpack.c.b16 %v1054, %v1054
      %1056 = vrot.lane.b32.xlu0 %v1055, 112
      %v1057 = vpop.permute.xlu0 %1056
      %v1059 = vunpack.c.l.b16 %v1013
      %v1060 = vpack.c.b16 %v1059, %v1059
      %1061 = vrot.lane.b32.xlu0 %v1060, 16
      %v1062 = vpop.permute.xlu0 %1061
      %v1064 = vunpack.c.l.b16 %v987
      %v1065 = vpack.c.b16 %v1064, %v1064
      %1066 = vrot.lane.b32.xlu0 %v1065, 32
      %v1067 = vpop.permute.xlu0 %1066
      %v1069 = vunpack.c.l.b16 %v1021
      %v1070 = vpack.c.b16 %v1069, %v1069
      %1071 = vrot.lane.b32.xlu0 %v1070, 48
      %v1072 = vpop.permute.xlu0 %1071
      %v1074 = vunpack.c.l.b16 %v986
      %v1075 = vpack.c.b16 %v1074, %v1074
      %1076 = vrot.lane.b32.xlu0 %v1075, 64
      %v1077 = vpop.permute.xlu0 %1076
      %v1079 = vunpack.c.l.b16 %v1020
      %v1080 = vpack.c.b16 %v1079, %v1079
      %1081 = vrot.lane.b32.xlu0 %v1080, 80
      %v1082 = vpop.permute.xlu0 %1081
      %v1084 = vunpack.c.l.b16 %v988
      %v1085 = vpack.c.b16 %v1084, %v1084
      %1086 = vrot.lane.b32.xlu0 %v1085, 96
      %v1087 = vpop.permute.xlu0 %1086
      %v1089 = vunpack.c.l.b16 %v1022
      %v1090 = vpack.c.b16 %v1089, %v1089
      %1091 = vrot.lane.b32.xlu0 %v1090, 112
      %v1092 = vpop.permute.xlu0 %1091
      %v1095 = vsel %vm425, %v911, %v1027
      %v1097 = vsel %vm429, %v1095, %v1032
      %v1099 = vsel %vm432, %v1097, %v1037
      %v1101 = vsel %vm435, %v1099, %v1042
      %v1103 = vsel %vm438, %v1101, %v1047
      %v1105 = vsel %vm441, %v1103, %v1052
      %v1107 = vsel %vm444, %v1105, %v1057
      %v1110 = vsel %vm425, %v979, %v1062
      %v1112 = vsel %vm429, %v1110, %v1067
      %v1114 = vsel %vm432, %v1112, %v1072
      %v1116 = vsel %vm435, %v1114, %v1077
      %v1118 = vsel %vm438, %v1116, %v1082
      %v1120 = vsel %vm441, %v1118, %v1087
      %v1122 = vsel %vm444, %v1120, %v1092
      %s1123 = scalar_lea.vmem %s1, 8
      %v1124 = vld [vmem:[%s1123] sm:$0xf]
      %v1126 = vsel %vm749, %v1124, 0
      %v1128 = vsel %vm753, %v1107, 0
      %v1130 = vsel %vm753, %v1122, 0
      %1132 = vmatprep.subr.bf16.mxu0 0
      %1133 = vmatpush1.bf16.msra.mxu0 0
      %1134 = vmatprep.subr.bf16.mxu0 0
      %1135 = vmatpush1.bf16.msra.mxu0 0
      %1136 = vmatprep.subr.bf16.mxu0 0
      %1137 = vmatpush1.bf16.msra.mxu0 0
      %1138 = vmatprep.subr.bf16.mxu0 0
      %1139 = vmatpush1.bf16.msra.mxu0 0
      %1140 = vmatprep.subr.bf16.mxu0 0
      %1141 = vmatpush1.bf16.msra.mxu0 0
      %1142 = vmatprep.subr.bf16.mxu0 0
      %1143 = vmatpush1.bf16.msra.mxu0 0
      %1144 = vmatprep.subr.bf16.mxu0 0
      %1145 = vmatpush1.bf16.msra.mxu0 0
      %1146 = vmatprep.subr.bf16.mxu0 %v1130
      %1147 = vmatpush1.bf16.msra.mxu0 %v1128
      %1148 = vmatprep.subr.bf16.mxu0 0
      %1149 = vmatpush2.bf16.msra.mxu0 0
      %1150 = vmatprep.subr.bf16.mxu0 0
      %1151 = vmatpush2.bf16.msra.mxu0 0
      %1152 = vmatprep.subr.bf16.mxu0 0
      %1153 = vmatpush2.bf16.msra.mxu0 0
      %1154 = vmatprep.subr.bf16.mxu0 0
      %1155 = vmatpush2.bf16.msra.mxu0 0
      %1156 = vmatprep.subr.bf16.mxu0 0
      %1157 = vmatpush2.bf16.msra.mxu0 0
      %1158 = vmatprep.subr.bf16.mxu0 0
      %1159 = vmatpush2.bf16.msra.mxu0 0
      %1160 = vmatprep.subr.bf16.mxu0 0
      %1161 = vmatpush2.bf16.msra.mxu0 0
      %1162 = vmatprep.subr.bf16.mxu0 0
      %1163 = vmatpush2.bf16.msra.mxu0 0
      %1164 = vmatprep.mubr.bf16.mxu0 0
      %1165 = vmatmul.mubr.bf16.gmra.mxu0 %v1126
      %v1166 = vpop.f32.mrf.mxu0
      %v1167 = vadd.f32 0.0, %v1166
      %v1168 = vpop.f32.mrf.mxu0
      %v1169 = vadd.f32 0.0, %v1168
      %v1170 = vpop.f32.mrf.mxu0
      %v1171 = vpop.f32.mrf.mxu0
      %1172 = vdwg.mxu0
      %v1173 = vadd.f32 %v841, %v1167
      %v1174 = vadd.f32 %v843, %v1169
      %vm1175 = vsmask.f32 3328
      %vm1176 = vsmask.f32 7440
      %vm1177 = vmor %vm1175, %vm1176
      %v1179 = vrot.slane %v198, 4
      %v1180 = vshll.u32 %v183, 16
      %v1182 = vrot.slane %v1180, 5
      %v1183 = vor.u32 %v1179, %v1182
      %v1184 = vrot.slane %v1183, 4
      %v1185 = vshll.u32 %v184, 16
      %v1187 = vrot.slane %v1185, 5
      %v1188 = vsel %vm1177, %v1184, %v1187
      %v1190 = vrot.slane %v210, 4
      %v1191 = vor.u32 %v1190, %v1187
      %v1192 = vrot.slane %v1191, 4
      %v1194 = vshll.u32 %v185, 16
      %v1196 = vrot.slane %v1194, 5
      %v1197 = vsel %vm1177, %v1192, %v1196
      %v1199 = vrot.slane %v199, 4
      %v1200 = vshll.u32 %v186, 16
      %v1202 = vrot.slane %v1200, 5
      %v1203 = vor.u32 %v1199, %v1202
      %v1204 = vrot.slane %v1203, 4
      %v1205 = vshll.u32 %v187, 16
      %v1207 = vrot.slane %v1205, 5
      %v1208 = vsel %vm1177, %v1204, %v1207
      %v1210 = vrot.slane %v211, 4
      %v1211 = vor.u32 %v1210, %v1207
      %v1212 = vrot.slane %v1211, 4
      %v1214 = vshll.u32 %v188, 16
      %v1216 = vrot.slane %v1214, 5
      %v1217 = vsel %vm1177, %v1212, %v1216
      %v1219 = vrot.slane %v204, 4
      %v1220 = vshll.u32 %v189, 16
      %v1222 = vrot.slane %v1220, 5
      %v1223 = vor.u32 %v1219, %v1222
      %v1224 = vrot.slane %v1223, 4
      %v1225 = vshll.u32 %v190, 16
      %v1227 = vrot.slane %v1225, 5
      %v1228 = vsel %vm1177, %v1224, %v1227
      %v1230 = vrot.slane %v216, 4
      %v1231 = vor.u32 %v1230, %v1227
      %v1232 = vrot.slane %v1231, 4
      %v1234 = vshll.u32 %v191, 16
      %v1236 = vrot.slane %v1234, 5
      %v1237 = vsel %vm1177, %v1232, %v1236
      %v1239 = vrot.slane %v205, 4
      %v1240 = vshll.u32 %v192, 16
      %v1242 = vrot.slane %v1240, 5
      %v1243 = vor.u32 %v1239, %v1242
      %v1244 = vrot.slane %v1243, 4
      %v1245 = vshll.u32 %v193, 16
      %v1247 = vrot.slane %v1245, 5
      %v1248 = vsel %vm1177, %v1244, %v1247
      %v1250 = vrot.slane %v217, 4
      %v1251 = vor.u32 %v1250, %v1247
      %v1252 = vrot.slane %v1251, 4
      %v1254 = vshll.u32 %v194, 16
      %v1256 = vrot.slane %v1254, 5
      %v1257 = vsel %vm1177, %v1252, %v1256
      %v1260 = vpack.i.b16 %v1208, %v1188
      %v1261 = vshrl.u32 %v1188, 16
      %v1262 = vshrl.u32 %v1208, 16
      %v1263 = vpack.i.b16 %v1262, %v1261
      %v1266 = vpack.i.b16 %v1248, %v1228
      %v1267 = vshrl.u32 %v1228, 16
      %v1268 = vshrl.u32 %v1248, 16
      %v1269 = vpack.i.b16 %v1268, %v1267
      %v1272 = vpack.i.b16 %v1217, %v1197
      %v1273 = vshrl.u32 %v1197, 16
      %v1274 = vshrl.u32 %v1217, 16
      %v1275 = vpack.i.b16 %v1274, %v1273
      %v1278 = vpack.i.b16 %v1257, %v1237
      %v1279 = vshrl.u32 %v1237, 16
      %v1280 = vshrl.u32 %v1257, 16
      %v1281 = vpack.i.b16 %v1280, %v1279
      %v1284 = vunpack.c.l.s4 1983009808
      %v1285 = vunpack.c.0.s8 %v1284
      %v1286 = vlaneseq
      %v1287 = vshrl.u32 %v1286, 7
      %v1288 = vsub.s32 %v1285, %v1287
      %v1289 = vrot.slane %v1260, %v1288
      %v1292 = vunpack.c.l.s4 1983009808
      %v1293 = vunpack.c.0.s8 %v1292
      %v1294 = vlaneseq
      %v1295 = vshrl.u32 %v1294, 7
      %v1296 = vsub.s32 %v1293, %v1295
      %v1297 = vrot.slane %v1266, %v1296
      %v1298 = vcombine.low %v1289, %v1297
      %v1299 = vcombine.high %v1289, %v1297
      %v1301 = vunpack.c.l.s4 1934713408
      %v1302 = vunpack.c.0.s8 %v1301
      %v1303 = vlaneseq
      %v1304 = vshrl.u32 %v1303, 7
      %v1305 = vsub.s32 %v1302, %v1304
      %v1306 = vrot.slane %v1298, %v1305
      %v1308 = vunpack.c.l.s4 1934713408
      %v1309 = vunpack.c.0.s8 %v1308
      %v1310 = vlaneseq
      %v1311 = vshrl.u32 %v1310, 7
      %v1312 = vsub.s32 %v1309, %v1311
      %v1313 = vrot.slane %v1299, %v1312
      %v1314 = vcombine.high %v1306, 0
      %v1315 = vcombine.high %v1313, 0
      %v1318 = vunpack.c.l.s4 1983009808
      %v1319 = vunpack.c.0.s8 %v1318
      %v1320 = vlaneseq
      %v1321 = vshrl.u32 %v1320, 7
      %v1322 = vsub.s32 %v1319, %v1321
      %v1323 = vrot.slane %v1263, %v1322
      %v1326 = vunpack.c.l.s4 1983009808
      %v1327 = vunpack.c.0.s8 %v1326
      %v1328 = vlaneseq
      %v1329 = vshrl.u32 %v1328, 7
      %v1330 = vsub.s32 %v1327, %v1329
      %v1331 = vrot.slane %v1269, %v1330
      %v1332 = vcombine.low %v1323, %v1331
      %v1333 = vcombine.high %v1323, %v1331
      %v1335 = vunpack.c.l.s4 1934713408
      %v1336 = vunpack.c.0.s8 %v1335
      %v1337 = vlaneseq
      %v1338 = vshrl.u32 %v1337, 7
      %v1339 = vsub.s32 %v1336, %v1338
      %v1340 = vrot.slane %v1332, %v1339
      %v1342 = vunpack.c.l.s4 1934713408
      %v1343 = vunpack.c.0.s8 %v1342
      %v1344 = vlaneseq
      %v1345 = vshrl.u32 %v1344, 7
      %v1346 = vsub.s32 %v1343, %v1345
      %v1347 = vrot.slane %v1333, %v1346
      %v1348 = vcombine.high %v1340, 0
      %v1349 = vcombine.high %v1347, 0
      %v1352 = vunpack.c.l.s4 1983009808
      %v1353 = vunpack.c.0.s8 %v1352
      %v1354 = vlaneseq
      %v1355 = vshrl.u32 %v1354, 7
      %v1356 = vsub.s32 %v1353, %v1355
      %v1357 = vrot.slane %v1272, %v1356
      %v1360 = vunpack.c.l.s4 1983009808
      %v1361 = vunpack.c.0.s8 %v1360
      %v1362 = vlaneseq
      %v1363 = vshrl.u32 %v1362, 7
      %v1364 = vsub.s32 %v1361, %v1363
      %v1365 = vrot.slane %v1278, %v1364
      %v1366 = vcombine.low %v1357, %v1365
      %v1367 = vcombine.high %v1357, %v1365
      %v1369 = vunpack.c.l.s4 1934713408
      %v1370 = vunpack.c.0.s8 %v1369
      %v1371 = vlaneseq
      %v1372 = vshrl.u32 %v1371, 7
      %v1373 = vsub.s32 %v1370, %v1372
      %v1374 = vrot.slane %v1366, %v1373
      %v1376 = vunpack.c.l.s4 1934713408
      %v1377 = vunpack.c.0.s8 %v1376
      %v1378 = vlaneseq
      %v1379 = vshrl.u32 %v1378, 7
      %v1380 = vsub.s32 %v1377, %v1379
      %v1381 = vrot.slane %v1367, %v1380
      %v1382 = vcombine.high %v1374, 0
      %v1383 = vcombine.high %v1381, 0
      %v1386 = vunpack.c.l.s4 1983009808
      %v1387 = vunpack.c.0.s8 %v1386
      %v1388 = vlaneseq
      %v1389 = vshrl.u32 %v1388, 7
      %v1390 = vsub.s32 %v1387, %v1389
      %v1391 = vrot.slane %v1275, %v1390
      %v1394 = vunpack.c.l.s4 1983009808
      %v1395 = vunpack.c.0.s8 %v1394
      %v1396 = vlaneseq
      %v1397 = vshrl.u32 %v1396, 7
      %v1398 = vsub.s32 %v1395, %v1397
      %v1399 = vrot.slane %v1281, %v1398
      %v1400 = vcombine.low %v1391, %v1399
      %v1401 = vcombine.high %v1391, %v1399
      %v1403 = vunpack.c.l.s4 1934713408
      %v1404 = vunpack.c.0.s8 %v1403
      %v1405 = vlaneseq
      %v1406 = vshrl.u32 %v1405, 7
      %v1407 = vsub.s32 %v1404, %v1406
      %v1408 = vrot.slane %v1400, %v1407
      %v1410 = vunpack.c.l.s4 1934713408
      %v1411 = vunpack.c.0.s8 %v1410
      %v1412 = vlaneseq
      %v1413 = vshrl.u32 %v1412, 7
      %v1414 = vsub.s32 %v1411, %v1413
      %v1415 = vrot.slane %v1401, %v1414
      %v1416 = vcombine.high %v1408, 0
      %v1417 = vcombine.high %v1415, 0
      %v1419 = vunpack.c.l.b16 %v1340
      %v1420 = vpack.c.b16 %v1419, %v1419
      %1421 = vrot.lane.b32.xlu0 %v1420, 16
      %v1422 = vpop.permute.xlu0 %1421
      %v1424 = vunpack.c.l.b16 %v1314
      %v1425 = vpack.c.b16 %v1424, %v1424
      %1426 = vrot.lane.b32.xlu0 %v1425, 32
      %v1427 = vpop.permute.xlu0 %1426
      %v1429 = vunpack.c.l.b16 %v1348
      %v1430 = vpack.c.b16 %v1429, %v1429
      %1431 = vrot.lane.b32.xlu0 %v1430, 48
      %v1432 = vpop.permute.xlu0 %1431
      %v1434 = vunpack.c.l.b16 %v1313
      %v1435 = vpack.c.b16 %v1434, %v1434
      %1436 = vrot.lane.b32.xlu0 %v1435, 64
      %v1437 = vpop.permute.xlu0 %1436
      %v1439 = vunpack.c.l.b16 %v1347
      %v1440 = vpack.c.b16 %v1439, %v1439
      %1441 = vrot.lane.b32.xlu0 %v1440, 80
      %v1442 = vpop.permute.xlu0 %1441
      %v1444 = vunpack.c.l.b16 %v1315
      %v1445 = vpack.c.b16 %v1444, %v1444
      %1446 = vrot.lane.b32.xlu0 %v1445, 96
      %v1447 = vpop.permute.xlu0 %1446
      %v1449 = vunpack.c.l.b16 %v1349
      %v1450 = vpack.c.b16 %v1449, %v1449
      %1451 = vrot.lane.b32.xlu0 %v1450, 112
      %v1452 = vpop.permute.xlu0 %1451
      %v1454 = vunpack.c.l.b16 %v1408
      %v1455 = vpack.c.b16 %v1454, %v1454
      %1456 = vrot.lane.b32.xlu0 %v1455, 16
      %v1457 = vpop.permute.xlu0 %1456
      %v1459 = vunpack.c.l.b16 %v1382
      %v1460 = vpack.c.b16 %v1459, %v1459
      %1461 = vrot.lane.b32.xlu0 %v1460, 32
      %v1462 = vpop.permute.xlu0 %1461
      %v1464 = vunpack.c.l.b16 %v1416
      %v1465 = vpack.c.b16 %v1464, %v1464
      %1466 = vrot.lane.b32.xlu0 %v1465, 48
      %v1467 = vpop.permute.xlu0 %1466
      %v1469 = vunpack.c.l.b16 %v1381
      %v1470 = vpack.c.b16 %v1469, %v1469
      %1471 = vrot.lane.b32.xlu0 %v1470, 64
      %v1472 = vpop.permute.xlu0 %1471
      %v1474 = vunpack.c.l.b16 %v1415
      %v1475 = vpack.c.b16 %v1474, %v1474
      %1476 = vrot.lane.b32.xlu0 %v1475, 80
      %v1477 = vpop.permute.xlu0 %1476
      %v1479 = vunpack.c.l.b16 %v1383
      %v1480 = vpack.c.b16 %v1479, %v1479
      %1481 = vrot.lane.b32.xlu0 %v1480, 96
      %v1482 = vpop.permute.xlu0 %1481
      %v1484 = vunpack.c.l.b16 %v1417
      %v1485 = vpack.c.b16 %v1484, %v1484
      %1486 = vrot.lane.b32.xlu0 %v1485, 112
      %v1487 = vpop.permute.xlu0 %1486
      %v1490 = vsel %vm425, %v1306, %v1422
      %v1492 = vsel %vm429, %v1490, %v1427
      %v1494 = vsel %vm432, %v1492, %v1432
      %v1496 = vsel %vm435, %v1494, %v1437
      %v1498 = vsel %vm438, %v1496, %v1442
      %v1500 = vsel %vm441, %v1498, %v1447
      %v1502 = vsel %vm444, %v1500, %v1452
      %v1505 = vsel %vm425, %v1374, %v1457
      %v1507 = vsel %vm429, %v1505, %v1462
      %v1509 = vsel %vm432, %v1507, %v1467
      %v1511 = vsel %vm435, %v1509, %v1472
      %v1513 = vsel %vm438, %v1511, %v1477
      %v1515 = vsel %vm441, %v1513, %v1482
      %v1517 = vsel %vm444, %v1515, %v1487
      %s1518 = scalar_lea.vmem %s1, 12
      %v1519 = vld [vmem:[%s1518] sm:$0xf]
      %v1521 = vsel %vm749, %v1519, 0
      %v1523 = vsel %vm753, %v1502, 0
      %v1525 = vsel %vm753, %v1517, 0
      %1527 = vmatprep.subr.bf16.mxu0 0
      %1528 = vmatpush1.bf16.msra.mxu0 0
      %1529 = vmatprep.subr.bf16.mxu0 0
      %1530 = vmatpush1.bf16.msra.mxu0 0
      %1531 = vmatprep.subr.bf16.mxu0 0
      %1532 = vmatpush1.bf16.msra.mxu0 0
      %1533 = vmatprep.subr.bf16.mxu0 0
      %1534 = vmatpush1.bf16.msra.mxu0 0
      %1535 = vmatprep.subr.bf16.mxu0 0
      %1536 = vmatpush1.bf16.msra.mxu0 0
      %1537 = vmatprep.subr.bf16.mxu0 0
      %1538 = vmatpush1.bf16.msra.mxu0 0
      %1539 = vmatprep.subr.bf16.mxu0 0
      %1540 = vmatpush1.bf16.msra.mxu0 0
      %1541 = vmatprep.subr.bf16.mxu0 %v1525
      %1542 = vmatpush1.bf16.msra.mxu0 %v1523
      %1543 = vmatprep.subr.bf16.mxu0 0
      %1544 = vmatpush2.bf16.msra.mxu0 0
      %1545 = vmatprep.subr.bf16.mxu0 0
      %1546 = vmatpush2.bf16.msra.mxu0 0
      %1547 = vmatprep.subr.bf16.mxu0 0
      %1548 = vmatpush2.bf16.msra.mxu0 0
      %1549 = vmatprep.subr.bf16.mxu0 0
      %1550 = vmatpush2.bf16.msra.mxu0 0
      %1551 = vmatprep.subr.bf16.mxu0 0
      %1552 = vmatpush2.bf16.msra.mxu0 0
      %1553 = vmatprep.subr.bf16.mxu0 0
      %1554 = vmatpush2.bf16.msra.mxu0 0
      %1555 = vmatprep.subr.bf16.mxu0 0
      %1556 = vmatpush2.bf16.msra.mxu0 0
      %1557 = vmatprep.subr.bf16.mxu0 0
      %1558 = vmatpush2.bf16.msra.mxu0 0
      %1559 = vmatprep.mubr.bf16.mxu0 0
      %1560 = vmatmul.mubr.bf16.gmra.mxu0 %v1521
      %v1561 = vpop.f32.mrf.mxu0
      %v1562 = vadd.f32 0.0, %v1561
      %v1563 = vpop.f32.mrf.mxu0
      %v1564 = vadd.f32 0.0, %v1563
      %v1565 = vpop.f32.mrf.mxu0
      %v1566 = vpop.f32.mrf.mxu0
      %1567 = vdwg.mxu0
      %v1568 = vadd.f32 %v1173, %v1562
      %v1569 = vadd.f32 %v1174, %v1564
      %1570 = vrot.lane.b32.xlu0 %v1188, 127
      %v1571 = vpop.permute.xlu0 %1570
      %1572 = vrot.lane.b32.xlu0 %v1197, 127
      %v1573 = vpop.permute.xlu0 %1572
      %1574 = vrot.lane.b32.xlu0 %v1208, 127
      %v1575 = vpop.permute.xlu0 %1574
      %1576 = vrot.lane.b32.xlu0 %v1217, 127
      %v1577 = vpop.permute.xlu0 %1576
      %1578 = vrot.lane.b32.xlu0 %v1228, 127
      %v1579 = vpop.permute.xlu0 %1578
      %1580 = vrot.lane.b32.xlu0 %v1237, 127
      %v1581 = vpop.permute.xlu0 %1580
      %1582 = vrot.lane.b32.xlu0 %v1248, 127
      %v1583 = vpop.permute.xlu0 %1582
      %1584 = vrot.lane.b32.xlu0 %v1257, 127
      %v1585 = vpop.permute.xlu0 %1584
      %v1588 = vpack.i.b16 %v1575, %v1571
      %v1589 = vshrl.u32 %v1571, 16
      %v1590 = vshrl.u32 %v1575, 16
      %v1591 = vpack.i.b16 %v1590, %v1589
      %v1594 = vpack.i.b16 %v1583, %v1579
      %v1595 = vshrl.u32 %v1579, 16
      %v1596 = vshrl.u32 %v1583, 16
      %v1597 = vpack.i.b16 %v1596, %v1595
      %v1600 = vpack.i.b16 %v1577, %v1573
      %v1601 = vshrl.u32 %v1573, 16
      %v1602 = vshrl.u32 %v1577, 16
      %v1603 = vpack.i.b16 %v1602, %v1601
      %v1606 = vpack.i.b16 %v1585, %v1581
      %v1607 = vshrl.u32 %v1581, 16
      %v1608 = vshrl.u32 %v1585, 16
      %v1609 = vpack.i.b16 %v1608, %v1607
      %v1612 = vunpack.c.l.s4 1983009808
      %v1613 = vunpack.c.0.s8 %v1612
      %v1614 = vlaneseq
      %v1615 = vshrl.u32 %v1614, 7
      %v1616 = vsub.s32 %v1613, %v1615
      %v1617 = vrot.slane %v1588, %v1616
      %v1620 = vunpack.c.l.s4 1983009808
      %v1621 = vunpack.c.0.s8 %v1620
      %v1622 = vlaneseq
      %v1623 = vshrl.u32 %v1622, 7
      %v1624 = vsub.s32 %v1621, %v1623
      %v1625 = vrot.slane %v1594, %v1624
      %v1626 = vcombine.low %v1617, %v1625
      %v1627 = vcombine.high %v1617, %v1625
      %v1629 = vunpack.c.l.s4 1934713408
      %v1630 = vunpack.c.0.s8 %v1629
      %v1631 = vlaneseq
      %v1632 = vshrl.u32 %v1631, 7
      %v1633 = vsub.s32 %v1630, %v1632
      %v1634 = vrot.slane %v1626, %v1633
      %v1636 = vunpack.c.l.s4 1934713408
      %v1637 = vunpack.c.0.s8 %v1636
      %v1638 = vlaneseq
      %v1639 = vshrl.u32 %v1638, 7
      %v1640 = vsub.s32 %v1637, %v1639
      %v1641 = vrot.slane %v1627, %v1640
      %v1642 = vcombine.high %v1634, 0
      %v1643 = vcombine.high %v1641, 0
      %v1646 = vunpack.c.l.s4 1983009808
      %v1647 = vunpack.c.0.s8 %v1646
      %v1648 = vlaneseq
      %v1649 = vshrl.u32 %v1648, 7
      %v1650 = vsub.s32 %v1647, %v1649
      %v1651 = vrot.slane %v1591, %v1650
      %v1654 = vunpack.c.l.s4 1983009808
      %v1655 = vunpack.c.0.s8 %v1654
      %v1656 = vlaneseq
      %v1657 = vshrl.u32 %v1656, 7
      %v1658 = vsub.s32 %v1655, %v1657
      %v1659 = vrot.slane %v1597, %v1658
      %v1660 = vcombine.low %v1651, %v1659
      %v1661 = vcombine.high %v1651, %v1659
      %v1663 = vunpack.c.l.s4 1934713408
      %v1664 = vunpack.c.0.s8 %v1663
      %v1665 = vlaneseq
      %v1666 = vshrl.u32 %v1665, 7
      %v1667 = vsub.s32 %v1664, %v1666
      %v1668 = vrot.slane %v1660, %v1667
      %v1670 = vunpack.c.l.s4 1934713408
      %v1671 = vunpack.c.0.s8 %v1670
      %v1672 = vlaneseq
      %v1673 = vshrl.u32 %v1672, 7
      %v1674 = vsub.s32 %v1671, %v1673
      %v1675 = vrot.slane %v1661, %v1674
      %v1676 = vcombine.high %v1668, 0
      %v1677 = vcombine.high %v1675, 0
      %v1680 = vunpack.c.l.s4 1983009808
      %v1681 = vunpack.c.0.s8 %v1680
      %v1682 = vlaneseq
      %v1683 = vshrl.u32 %v1682, 7
      %v1684 = vsub.s32 %v1681, %v1683
      %v1685 = vrot.slane %v1600, %v1684
      %v1688 = vunpack.c.l.s4 1983009808
      %v1689 = vunpack.c.0.s8 %v1688
      %v1690 = vlaneseq
      %v1691 = vshrl.u32 %v1690, 7
      %v1692 = vsub.s32 %v1689, %v1691
      %v1693 = vrot.slane %v1606, %v1692
      %v1694 = vcombine.low %v1685, %v1693
      %v1695 = vcombine.high %v1685, %v1693
      %v1697 = vunpack.c.l.s4 1934713408
      %v1698 = vunpack.c.0.s8 %v1697
      %v1699 = vlaneseq
      %v1700 = vshrl.u32 %v1699, 7
      %v1701 = vsub.s32 %v1698, %v1700
      %v1702 = vrot.slane %v1694, %v1701
      %v1704 = vunpack.c.l.s4 1934713408
      %v1705 = vunpack.c.0.s8 %v1704
      %v1706 = vlaneseq
      %v1707 = vshrl.u32 %v1706, 7
      %v1708 = vsub.s32 %v1705, %v1707
      %v1709 = vrot.slane %v1695, %v1708
      %v1710 = vcombine.high %v1702, 0
      %v1711 = vcombine.high %v1709, 0
      %v1714 = vunpack.c.l.s4 1983009808
      %v1715 = vunpack.c.0.s8 %v1714
      %v1716 = vlaneseq
      %v1717 = vshrl.u32 %v1716, 7
      %v1718 = vsub.s32 %v1715, %v1717
      %v1719 = vrot.slane %v1603, %v1718
      %v1722 = vunpack.c.l.s4 1983009808
      %v1723 = vunpack.c.0.s8 %v1722
      %v1724 = vlaneseq
      %v1725 = vshrl.u32 %v1724, 7
      %v1726 = vsub.s32 %v1723, %v1725
      %v1727 = vrot.slane %v1609, %v1726
      %v1728 = vcombine.low %v1719, %v1727
      %v1729 = vcombine.high %v1719, %v1727
      %v1731 = vunpack.c.l.s4 1934713408
      %v1732 = vunpack.c.0.s8 %v1731
      %v1733 = vlaneseq
      %v1734 = vshrl.u32 %v1733, 7
      %v1735 = vsub.s32 %v1732, %v1734
      %v1736 = vrot.slane %v1728, %v1735
      %v1738 = vunpack.c.l.s4 1934713408
      %v1739 = vunpack.c.0.s8 %v1738
      %v1740 = vlaneseq
      %v1741 = vshrl.u32 %v1740, 7
      %v1742 = vsub.s32 %v1739, %v1741
      %v1743 = vrot.slane %v1729, %v1742
      %v1744 = vcombine.high %v1736, 0
      %v1745 = vcombine.high %v1743, 0
      %v1747 = vunpack.c.l.b16 %v1668
      %v1748 = vpack.c.b16 %v1747, %v1747
      %1749 = vrot.lane.b32.xlu0 %v1748, 16
      %v1750 = vpop.permute.xlu0 %1749
      %v1752 = vunpack.c.l.b16 %v1642
      %v1753 = vpack.c.b16 %v1752, %v1752
      %1754 = vrot.lane.b32.xlu0 %v1753, 32
      %v1755 = vpop.permute.xlu0 %1754
      %v1757 = vunpack.c.l.b16 %v1676
      %v1758 = vpack.c.b16 %v1757, %v1757
      %1759 = vrot.lane.b32.xlu0 %v1758, 48
      %v1760 = vpop.permute.xlu0 %1759
      %v1762 = vunpack.c.l.b16 %v1641
      %v1763 = vpack.c.b16 %v1762, %v1762
      %1764 = vrot.lane.b32.xlu0 %v1763, 64
      %v1765 = vpop.permute.xlu0 %1764
      %v1767 = vunpack.c.l.b16 %v1675
      %v1768 = vpack.c.b16 %v1767, %v1767
      %1769 = vrot.lane.b32.xlu0 %v1768, 80
      %v1770 = vpop.permute.xlu0 %1769
      %v1772 = vunpack.c.l.b16 %v1643
      %v1773 = vpack.c.b16 %v1772, %v1772
      %1774 = vrot.lane.b32.xlu0 %v1773, 96
      %v1775 = vpop.permute.xlu0 %1774
      %v1777 = vunpack.c.l.b16 %v1677
      %v1778 = vpack.c.b16 %v1777, %v1777
      %1779 = vrot.lane.b32.xlu0 %v1778, 112
      %v1780 = vpop.permute.xlu0 %1779
      %v1782 = vunpack.c.l.b16 %v1736
      %v1783 = vpack.c.b16 %v1782, %v1782
      %1784 = vrot.lane.b32.xlu0 %v1783, 16
      %v1785 = vpop.permute.xlu0 %1784
      %v1787 = vunpack.c.l.b16 %v1710
      %v1788 = vpack.c.b16 %v1787, %v1787
      %1789 = vrot.lane.b32.xlu0 %v1788, 32
      %v1790 = vpop.permute.xlu0 %1789
      %v1792 = vunpack.c.l.b16 %v1744
      %v1793 = vpack.c.b16 %v1792, %v1792
      %1794 = vrot.lane.b32.xlu0 %v1793, 48
      %v1795 = vpop.permute.xlu0 %1794
      %v1797 = vunpack.c.l.b16 %v1709
      %v1798 = vpack.c.b16 %v1797, %v1797
      %1799 = vrot.lane.b32.xlu0 %v1798, 64
      %v1800 = vpop.permute.xlu0 %1799
      %v1802 = vunpack.c.l.b16 %v1743
      %v1803 = vpack.c.b16 %v1802, %v1802
      %1804 = vrot.lane.b32.xlu0 %v1803, 80
      %v1805 = vpop.permute.xlu0 %1804
      %v1807 = vunpack.c.l.b16 %v1711
      %v1808 = vpack.c.b16 %v1807, %v1807
      %1809 = vrot.lane.b32.xlu0 %v1808, 96
      %v1810 = vpop.permute.xlu0 %1809
      %v1812 = vunpack.c.l.b16 %v1745
      %v1813 = vpack.c.b16 %v1812, %v1812
      %1814 = vrot.lane.b32.xlu0 %v1813, 112
      %v1815 = vpop.permute.xlu0 %1814
      %v1818 = vsel %vm425, %v1634, %v1750
      %v1820 = vsel %vm429, %v1818, %v1755
      %v1822 = vsel %vm432, %v1820, %v1760
      %v1824 = vsel %vm435, %v1822, %v1765
      %v1826 = vsel %vm438, %v1824, %v1770
      %v1828 = vsel %vm441, %v1826, %v1775
      %v1830 = vsel %vm444, %v1828, %v1780
      %v1833 = vsel %vm425, %v1702, %v1785
      %v1835 = vsel %vm429, %v1833, %v1790
      %v1837 = vsel %vm432, %v1835, %v1795
      %v1839 = vsel %vm435, %v1837, %v1800
      %v1841 = vsel %vm438, %v1839, %v1805
      %v1843 = vsel %vm441, %v1841, %v1810
      %v1845 = vsel %vm444, %v1843, %v1815
      %s1846 = scalar_lea.vmem %s1, 16
      %v1847 = vld [vmem:[%s1846] sm:$0xf]
      %v1849 = vsel %vm749, %v1847, 0
      %v1851 = vsel %vm753, %v1830, 0
      %v1853 = vsel %vm753, %v1845, 0
      %1855 = vmatprep.subr.bf16.mxu0 0
      %1856 = vmatpush1.bf16.msra.mxu0 0
      %1857 = vmatprep.subr.bf16.mxu0 0
      %1858 = vmatpush1.bf16.msra.mxu0 0
      %1859 = vmatprep.subr.bf16.mxu0 0
      %1860 = vmatpush1.bf16.msra.mxu0 0
      %1861 = vmatprep.subr.bf16.mxu0 0
      %1862 = vmatpush1.bf16.msra.mxu0 0
      %1863 = vmatprep.subr.bf16.mxu0 0
      %1864 = vmatpush1.bf16.msra.mxu0 0
      %1865 = vmatprep.subr.bf16.mxu0 0
      %1866 = vmatpush1.bf16.msra.mxu0 0
      %1867 = vmatprep.subr.bf16.mxu0 0
      %1868 = vmatpush1.bf16.msra.mxu0 0
      %1869 = vmatprep.subr.bf16.mxu0 %v1853
      %1870 = vmatpush1.bf16.msra.mxu0 %v1851
      %1871 = vmatprep.subr.bf16.mxu0 0
      %1872 = vmatpush2.bf16.msra.mxu0 0
      %1873 = vmatprep.subr.bf16.mxu0 0
      %1874 = vmatpush2.bf16.msra.mxu0 0
      %1875 = vmatprep.subr.bf16.mxu0 0
      %1876 = vmatpush2.bf16.msra.mxu0 0
      %1877 = vmatprep.subr.bf16.mxu0 0
      %1878 = vmatpush2.bf16.msra.mxu0 0
      %1879 = vmatprep.subr.bf16.mxu0 0
      %1880 = vmatpush2.bf16.msra.mxu0 0
      %1881 = vmatprep.subr.bf16.mxu0 0
      %1882 = vmatpush2.bf16.msra.mxu0 0
      %1883 = vmatprep.subr.bf16.mxu0 0
      %1884 = vmatpush2.bf16.msra.mxu0 0
      %1885 = vmatprep.subr.bf16.mxu0 0
      %1886 = vmatpush2.bf16.msra.mxu0 0
      %1887 = vmatprep.mubr.bf16.mxu0 0
      %1888 = vmatmul.mubr.bf16.gmra.mxu0 %v1849
      %v1889 = vpop.f32.mrf.mxu0
      %v1890 = vadd.f32 0.0, %v1889
      %v1891 = vpop.f32.mrf.mxu0
      %v1892 = vadd.f32 0.0, %v1891
      %v1893 = vpop.f32.mrf.mxu0
      %v1894 = vpop.f32.mrf.mxu0
      %1895 = vdwg.mxu0
      %v1896 = vadd.f32 %v1568, %v1890
      %v1897 = vadd.f32 %v1569, %v1892
      %1898 = vrot.lane.b32.xlu0 %v1188, 126
      %v1899 = vpop.permute.xlu0 %1898
      %1900 = vrot.lane.b32.xlu0 %v1197, 126
      %v1901 = vpop.permute.xlu0 %1900
      %1902 = vrot.lane.b32.xlu0 %v1208, 126
      %v1903 = vpop.permute.xlu0 %1902
      %1904 = vrot.lane.b32.xlu0 %v1217, 126
      %v1905 = vpop.permute.xlu0 %1904
      %1906 = vrot.lane.b32.xlu0 %v1228, 126
      %v1907 = vpop.permute.xlu0 %1906
      %1908 = vrot.lane.b32.xlu0 %v1237, 126
      %v1909 = vpop.permute.xlu0 %1908
      %1910 = vrot.lane.b32.xlu0 %v1248, 126
      %v1911 = vpop.permute.xlu0 %1910
      %1912 = vrot.lane.b32.xlu0 %v1257, 126
      %v1913 = vpop.permute.xlu0 %1912
      %v1916 = vpack.i.b16 %v1903, %v1899
      %v1917 = vshrl.u32 %v1899, 16
      %v1918 = vshrl.u32 %v1903, 16
      %v1919 = vpack.i.b16 %v1918, %v1917
      %v1922 = vpack.i.b16 %v1911, %v1907
      %v1923 = vshrl.u32 %v1907, 16
      %v1924 = vshrl.u32 %v1911, 16
      %v1925 = vpack.i.b16 %v1924, %v1923
      %v1928 = vpack.i.b16 %v1905, %v1901
      %v1929 = vshrl.u32 %v1901, 16
      %v1930 = vshrl.u32 %v1905, 16
      %v1931 = vpack.i.b16 %v1930, %v1929
      %v1934 = vpack.i.b16 %v1913, %v1909
      %v1935 = vshrl.u32 %v1909, 16
      %v1936 = vshrl.u32 %v1913, 16
      %v1937 = vpack.i.b16 %v1936, %v1935
      %v1940 = vunpack.c.l.s4 1983009808
      %v1941 = vunpack.c.0.s8 %v1940
      %v1942 = vlaneseq
      %v1943 = vshrl.u32 %v1942, 7
      %v1944 = vsub.s32 %v1941, %v1943
      %v1945 = vrot.slane %v1916, %v1944
      %v1948 = vunpack.c.l.s4 1983009808
      %v1949 = vunpack.c.0.s8 %v1948
      %v1950 = vlaneseq
      %v1951 = vshrl.u32 %v1950, 7
      %v1952 = vsub.s32 %v1949, %v1951
      %v1953 = vrot.slane %v1922, %v1952
      %v1954 = vcombine.low %v1945, %v1953
      %v1955 = vcombine.high %v1945, %v1953
      %v1957 = vunpack.c.l.s4 1934713408
      %v1958 = vunpack.c.0.s8 %v1957
      %v1959 = vlaneseq
      %v1960 = vshrl.u32 %v1959, 7
      %v1961 = vsub.s32 %v1958, %v1960
      %v1962 = vrot.slane %v1954, %v1961
      %v1964 = vunpack.c.l.s4 1934713408
      %v1965 = vunpack.c.0.s8 %v1964
      %v1966 = vlaneseq
      %v1967 = vshrl.u32 %v1966, 7
      %v1968 = vsub.s32 %v1965, %v1967
      %v1969 = vrot.slane %v1955, %v1968
      %v1970 = vcombine.high %v1962, 0
      %v1971 = vcombine.high %v1969, 0
      %v1974 = vunpack.c.l.s4 1983009808
      %v1975 = vunpack.c.0.s8 %v1974
      %v1976 = vlaneseq
      %v1977 = vshrl.u32 %v1976, 7
      %v1978 = vsub.s32 %v1975, %v1977
      %v1979 = vrot.slane %v1919, %v1978
      %v1982 = vunpack.c.l.s4 1983009808
      %v1983 = vunpack.c.0.s8 %v1982
      %v1984 = vlaneseq
      %v1985 = vshrl.u32 %v1984, 7
      %v1986 = vsub.s32 %v1983, %v1985
      %v1987 = vrot.slane %v1925, %v1986
      %v1988 = vcombine.low %v1979, %v1987
      %v1989 = vcombine.high %v1979, %v1987
      %v1991 = vunpack.c.l.s4 1934713408
      %v1992 = vunpack.c.0.s8 %v1991
      %v1993 = vlaneseq
      %v1994 = vshrl.u32 %v1993, 7
      %v1995 = vsub.s32 %v1992, %v1994
      %v1996 = vrot.slane %v1988, %v1995
      %v1998 = vunpack.c.l.s4 1934713408
      %v1999 = vunpack.c.0.s8 %v1998
      %v2000 = vlaneseq
      %v2001 = vshrl.u32 %v2000, 7
      %v2002 = vsub.s32 %v1999, %v2001
      %v2003 = vrot.slane %v1989, %v2002
      %v2004 = vcombine.high %v1996, 0
      %v2005 = vcombine.high %v2003, 0
      %v2008 = vunpack.c.l.s4 1983009808
      %v2009 = vunpack.c.0.s8 %v2008
      %v2010 = vlaneseq
      %v2011 = vshrl.u32 %v2010, 7
      %v2012 = vsub.s32 %v2009, %v2011
      %v2013 = vrot.slane %v1928, %v2012
      %v2016 = vunpack.c.l.s4 1983009808
      %v2017 = vunpack.c.0.s8 %v2016
      %v2018 = vlaneseq
      %v2019 = vshrl.u32 %v2018, 7
      %v2020 = vsub.s32 %v2017, %v2019
      %v2021 = vrot.slane %v1934, %v2020
      %v2022 = vcombine.low %v2013, %v2021
      %v2023 = vcombine.high %v2013, %v2021
      %v2025 = vunpack.c.l.s4 1934713408
      %v2026 = vunpack.c.0.s8 %v2025
      %v2027 = vlaneseq
      %v2028 = vshrl.u32 %v2027, 7
      %v2029 = vsub.s32 %v2026, %v2028
      %v2030 = vrot.slane %v2022, %v2029
      %v2032 = vunpack.c.l.s4 1934713408
      %v2033 = vunpack.c.0.s8 %v2032
      %v2034 = vlaneseq
      %v2035 = vshrl.u32 %v2034, 7
      %v2036 = vsub.s32 %v2033, %v2035
      %v2037 = vrot.slane %v2023, %v2036
      %v2038 = vcombine.high %v2030, 0
      %v2039 = vcombine.high %v2037, 0
      %v2042 = vunpack.c.l.s4 1983009808
      %v2043 = vunpack.c.0.s8 %v2042
      %v2044 = vlaneseq
      %v2045 = vshrl.u32 %v2044, 7
      %v2046 = vsub.s32 %v2043, %v2045
      %v2047 = vrot.slane %v1931, %v2046
      %v2050 = vunpack.c.l.s4 1983009808
      %v2051 = vunpack.c.0.s8 %v2050
      %v2052 = vlaneseq
      %v2053 = vshrl.u32 %v2052, 7
      %v2054 = vsub.s32 %v2051, %v2053
      %v2055 = vrot.slane %v1937, %v2054
      %v2056 = vcombine.low %v2047, %v2055
      %v2057 = vcombine.high %v2047, %v2055
      %v2059 = vunpack.c.l.s4 1934713408
      %v2060 = vunpack.c.0.s8 %v2059
      %v2061 = vlaneseq
      %v2062 = vshrl.u32 %v2061, 7
      %v2063 = vsub.s32 %v2060, %v2062
      %v2064 = vrot.slane %v2056, %v2063
      %v2066 = vunpack.c.l.s4 1934713408
      %v2067 = vunpack.c.0.s8 %v2066
      %v2068 = vlaneseq
      %v2069 = vshrl.u32 %v2068, 7
      %v2070 = vsub.s32 %v2067, %v2069
      %v2071 = vrot.slane %v2057, %v2070
      %v2072 = vcombine.high %v2064, 0
      %v2073 = vcombine.high %v2071, 0
      %v2075 = vunpack.c.l.b16 %v1996
      %v2076 = vpack.c.b16 %v2075, %v2075
      %2077 = vrot.lane.b32.xlu0 %v2076, 16
      %v2078 = vpop.permute.xlu0 %2077
      %v2080 = vunpack.c.l.b16 %v1970
      %v2081 = vpack.c.b16 %v2080, %v2080
      %2082 = vrot.lane.b32.xlu0 %v2081, 32
      %v2083 = vpop.permute.xlu0 %2082
      %v2085 = vunpack.c.l.b16 %v2004
      %v2086 = vpack.c.b16 %v2085, %v2085
      %2087 = vrot.lane.b32.xlu0 %v2086, 48
      %v2088 = vpop.permute.xlu0 %2087
      %v2090 = vunpack.c.l.b16 %v1969
      %v2091 = vpack.c.b16 %v2090, %v2090
      %2092 = vrot.lane.b32.xlu0 %v2091, 64
      %v2093 = vpop.permute.xlu0 %2092
      %v2095 = vunpack.c.l.b16 %v2003
      %v2096 = vpack.c.b16 %v2095, %v2095
      %2097 = vrot.lane.b32.xlu0 %v2096, 80
      %v2098 = vpop.permute.xlu0 %2097
      %v2100 = vunpack.c.l.b16 %v1971
      %v2101 = vpack.c.b16 %v2100, %v2100
      %2102 = vrot.lane.b32.xlu0 %v2101, 96
      %v2103 = vpop.permute.xlu0 %2102
      %v2105 = vunpack.c.l.b16 %v2005
      %v2106 = vpack.c.b16 %v2105, %v2105
      %2107 = vrot.lane.b32.xlu0 %v2106, 112
      %v2108 = vpop.permute.xlu0 %2107
      %v2110 = vunpack.c.l.b16 %v2064
      %v2111 = vpack.c.b16 %v2110, %v2110
      %2112 = vrot.lane.b32.xlu0 %v2111, 16
      %v2113 = vpop.permute.xlu0 %2112
      %v2115 = vunpack.c.l.b16 %v2038
      %v2116 = vpack.c.b16 %v2115, %v2115
      %2117 = vrot.lane.b32.xlu0 %v2116, 32
      %v2118 = vpop.permute.xlu0 %2117
      %v2120 = vunpack.c.l.b16 %v2072
      %v2121 = vpack.c.b16 %v2120, %v2120
      %2122 = vrot.lane.b32.xlu0 %v2121, 48
      %v2123 = vpop.permute.xlu0 %2122
      %v2125 = vunpack.c.l.b16 %v2037
      %v2126 = vpack.c.b16 %v2125, %v2125
      %2127 = vrot.lane.b32.xlu0 %v2126, 64
      %v2128 = vpop.permute.xlu0 %2127
      %v2130 = vunpack.c.l.b16 %v2071
      %v2131 = vpack.c.b16 %v2130, %v2130
      %2132 = vrot.lane.b32.xlu0 %v2131, 80
      %v2133 = vpop.permute.xlu0 %2132
      %v2135 = vunpack.c.l.b16 %v2039
      %v2136 = vpack.c.b16 %v2135, %v2135
      %2137 = vrot.lane.b32.xlu0 %v2136, 96
      %v2138 = vpop.permute.xlu0 %2137
      %v2140 = vunpack.c.l.b16 %v2073
      %v2141 = vpack.c.b16 %v2140, %v2140
      %2142 = vrot.lane.b32.xlu0 %v2141, 112
      %v2143 = vpop.permute.xlu0 %2142
      %v2146 = vsel %vm425, %v1962, %v2078
      %v2148 = vsel %vm429, %v2146, %v2083
      %v2150 = vsel %vm432, %v2148, %v2088
      %v2152 = vsel %vm435, %v2150, %v2093
      %v2154 = vsel %vm438, %v2152, %v2098
      %v2156 = vsel %vm441, %v2154, %v2103
      %v2158 = vsel %vm444, %v2156, %v2108
      %v2161 = vsel %vm425, %v2030, %v2113
      %v2163 = vsel %vm429, %v2161, %v2118
      %v2165 = vsel %vm432, %v2163, %v2123
      %v2167 = vsel %vm435, %v2165, %v2128
      %v2169 = vsel %vm438, %v2167, %v2133
      %v2171 = vsel %vm441, %v2169, %v2138
      %v2173 = vsel %vm444, %v2171, %v2143
      %s2174 = scalar_lea.vmem %s1, 20
      %v2175 = vld [vmem:[%s2174] sm:$0xf]
      %v2177 = vsel %vm749, %v2175, 0
      %v2179 = vsel %vm753, %v2158, 0
      %v2181 = vsel %vm753, %v2173, 0
      %2183 = vmatprep.subr.bf16.mxu0 0
      %2184 = vmatpush1.bf16.msra.mxu0 0
      %2185 = vmatprep.subr.bf16.mxu0 0
      %2186 = vmatpush1.bf16.msra.mxu0 0
      %2187 = vmatprep.subr.bf16.mxu0 0
      %2188 = vmatpush1.bf16.msra.mxu0 0
      %2189 = vmatprep.subr.bf16.mxu0 0
      %2190 = vmatpush1.bf16.msra.mxu0 0
      %2191 = vmatprep.subr.bf16.mxu0 0
      %2192 = vmatpush1.bf16.msra.mxu0 0
      %2193 = vmatprep.subr.bf16.mxu0 0
      %2194 = vmatpush1.bf16.msra.mxu0 0
      %2195 = vmatprep.subr.bf16.mxu0 0
      %2196 = vmatpush1.bf16.msra.mxu0 0
      %2197 = vmatprep.subr.bf16.mxu0 %v2181
      %2198 = vmatpush1.bf16.msra.mxu0 %v2179
      %2199 = vmatprep.subr.bf16.mxu0 0
      %2200 = vmatpush2.bf16.msra.mxu0 0
      %2201 = vmatprep.subr.bf16.mxu0 0
      %2202 = vmatpush2.bf16.msra.mxu0 0
      %2203 = vmatprep.subr.bf16.mxu0 0
      %2204 = vmatpush2.bf16.msra.mxu0 0
      %2205 = vmatprep.subr.bf16.mxu0 0
      %2206 = vmatpush2.bf16.msra.mxu0 0
      %2207 = vmatprep.subr.bf16.mxu0 0
      %2208 = vmatpush2.bf16.msra.mxu0 0
      %2209 = vmatprep.subr.bf16.mxu0 0
      %2210 = vmatpush2.bf16.msra.mxu0 0
      %2211 = vmatprep.subr.bf16.mxu0 0
      %2212 = vmatpush2.bf16.msra.mxu0 0
      %2213 = vmatprep.subr.bf16.mxu0 0
      %2214 = vmatpush2.bf16.msra.mxu0 0
      %2215 = vmatprep.mubr.bf16.mxu0 0
      %2216 = vmatmul.mubr.bf16.gmra.mxu0 %v2177
      %v2217 = vpop.f32.mrf.mxu0
      %v2218 = vadd.f32 0.0, %v2217
      %v2219 = vpop.f32.mrf.mxu0
      %v2220 = vadd.f32 0.0, %v2219
      %v2221 = vpop.f32.mrf.mxu0
      %v2222 = vpop.f32.mrf.mxu0
      %2223 = vdwg.mxu0
      %v2224 = vadd.f32 %v1896, %v2218
      %v2225 = vadd.f32 %v1897, %v2220
      %vm2230 = vcmask 1042432
      %vm2231 = vcmask 1046532
      %vm2232 = vmor %vm2230, %vm2231
      %v2233 = vrot.slane %v183, 5
      %v2234 = vrot.slane %v2233, 4
      %v2235 = vrot.slane %v184, 5
      %v2236 = vsel %vm2232, %v2234, %v2235
      %v2237 = vrot.slane %v2235, 4
      %v2238 = vrot.slane %v185, 5
      %v2239 = vsel %vm2232, %v2237, %v2238
      %v2240 = vrot.slane %v186, 5
      %v2241 = vrot.slane %v2240, 4
      %v2242 = vrot.slane %v187, 5
      %v2243 = vsel %vm2232, %v2241, %v2242
      %v2244 = vrot.slane %v2242, 4
      %v2245 = vrot.slane %v188, 5
      %v2246 = vsel %vm2232, %v2244, %v2245
      %v2247 = vrot.slane %v189, 5
      %v2248 = vrot.slane %v2247, 4
      %v2249 = vrot.slane %v190, 5
      %v2250 = vsel %vm2232, %v2248, %v2249
      %v2251 = vrot.slane %v2249, 4
      %v2252 = vrot.slane %v191, 5
      %v2253 = vsel %vm2232, %v2251, %v2252
      %v2254 = vrot.slane %v192, 5
      %v2255 = vrot.slane %v2254, 4
      %v2256 = vrot.slane %v193, 5
      %v2257 = vsel %vm2232, %v2255, %v2256
      %v2258 = vrot.slane %v2256, 4
      %v2259 = vrot.slane %v194, 5
      %v2260 = vsel %vm2232, %v2258, %v2259
      %v2263 = vpack.i.b16 %v2243, %v2236
      %v2264 = vshrl.u32 %v2236, 16
      %v2265 = vshrl.u32 %v2243, 16
      %v2266 = vpack.i.b16 %v2265, %v2264
      %v2269 = vpack.i.b16 %v2257, %v2250
      %v2270 = vshrl.u32 %v2250, 16
      %v2271 = vshrl.u32 %v2257, 16
      %v2272 = vpack.i.b16 %v2271, %v2270
      %v2275 = vpack.i.b16 %v2246, %v2239
      %v2276 = vshrl.u32 %v2239, 16
      %v2277 = vshrl.u32 %v2246, 16
      %v2278 = vpack.i.b16 %v2277, %v2276
      %v2281 = vpack.i.b16 %v2260, %v2253
      %v2282 = vshrl.u32 %v2253, 16
      %v2283 = vshrl.u32 %v2260, 16
      %v2284 = vpack.i.b16 %v2283, %v2282
      %v2287 = vunpack.c.l.s4 1983009808
      %v2288 = vunpack.c.0.s8 %v2287
      %v2289 = vlaneseq
      %v2290 = vshrl.u32 %v2289, 7
      %v2291 = vsub.s32 %v2288, %v2290
      %v2292 = vrot.slane %v2263, %v2291
      %v2295 = vunpack.c.l.s4 1983009808
      %v2296 = vunpack.c.0.s8 %v2295
      %v2297 = vlaneseq
      %v2298 = vshrl.u32 %v2297, 7
      %v2299 = vsub.s32 %v2296, %v2298
      %v2300 = vrot.slane %v2269, %v2299
      %v2301 = vcombine.low %v2292, %v2300
      %v2302 = vcombine.high %v2292, %v2300
      %v2304 = vunpack.c.l.s4 1934713408
      %v2305 = vunpack.c.0.s8 %v2304
      %v2306 = vlaneseq
      %v2307 = vshrl.u32 %v2306, 7
      %v2308 = vsub.s32 %v2305, %v2307
      %v2309 = vrot.slane %v2301, %v2308
      %v2311 = vunpack.c.l.s4 1934713408
      %v2312 = vunpack.c.0.s8 %v2311
      %v2313 = vlaneseq
      %v2314 = vshrl.u32 %v2313, 7
      %v2315 = vsub.s32 %v2312, %v2314
      %v2316 = vrot.slane %v2302, %v2315
      %v2317 = vcombine.high %v2309, 0
      %v2318 = vcombine.high %v2316, 0
      %v2321 = vunpack.c.l.s4 1983009808
      %v2322 = vunpack.c.0.s8 %v2321
      %v2323 = vlaneseq
      %v2324 = vshrl.u32 %v2323, 7
      %v2325 = vsub.s32 %v2322, %v2324
      %v2326 = vrot.slane %v2266, %v2325
      %v2329 = vunpack.c.l.s4 1983009808
      %v2330 = vunpack.c.0.s8 %v2329
      %v2331 = vlaneseq
      %v2332 = vshrl.u32 %v2331, 7
      %v2333 = vsub.s32 %v2330, %v2332
      %v2334 = vrot.slane %v2272, %v2333
      %v2335 = vcombine.low %v2326, %v2334
      %v2336 = vcombine.high %v2326, %v2334
      %v2338 = vunpack.c.l.s4 1934713408
      %v2339 = vunpack.c.0.s8 %v2338
      %v2340 = vlaneseq
      %v2341 = vshrl.u32 %v2340, 7
      %v2342 = vsub.s32 %v2339, %v2341
      %v2343 = vrot.slane %v2335, %v2342
      %v2345 = vunpack.c.l.s4 1934713408
      %v2346 = vunpack.c.0.s8 %v2345
      %v2347 = vlaneseq
      %v2348 = vshrl.u32 %v2347, 7
      %v2349 = vsub.s32 %v2346, %v2348
      %v2350 = vrot.slane %v2336, %v2349
      %v2351 = vcombine.high %v2343, 0
      %v2352 = vcombine.high %v2350, 0
      %v2355 = vunpack.c.l.s4 1983009808
      %v2356 = vunpack.c.0.s8 %v2355
      %v2357 = vlaneseq
      %v2358 = vshrl.u32 %v2357, 7
      %v2359 = vsub.s32 %v2356, %v2358
      %v2360 = vrot.slane %v2275, %v2359
      %v2363 = vunpack.c.l.s4 1983009808
      %v2364 = vunpack.c.0.s8 %v2363
      %v2365 = vlaneseq
      %v2366 = vshrl.u32 %v2365, 7
      %v2367 = vsub.s32 %v2364, %v2366
      %v2368 = vrot.slane %v2281, %v2367
      %v2369 = vcombine.low %v2360, %v2368
      %v2370 = vcombine.high %v2360, %v2368
      %v2372 = vunpack.c.l.s4 1934713408
      %v2373 = vunpack.c.0.s8 %v2372
      %v2374 = vlaneseq
      %v2375 = vshrl.u32 %v2374, 7
      %v2376 = vsub.s32 %v2373, %v2375
      %v2377 = vrot.slane %v2369, %v2376
      %v2379 = vunpack.c.l.s4 1934713408
      %v2380 = vunpack.c.0.s8 %v2379
      %v2381 = vlaneseq
      %v2382 = vshrl.u32 %v2381, 7
      %v2383 = vsub.s32 %v2380, %v2382
      %v2384 = vrot.slane %v2370, %v2383
      %v2385 = vcombine.high %v2377, 0
      %v2386 = vcombine.high %v2384, 0
      %v2389 = vunpack.c.l.s4 1983009808
      %v2390 = vunpack.c.0.s8 %v2389
      %v2391 = vlaneseq
      %v2392 = vshrl.u32 %v2391, 7
      %v2393 = vsub.s32 %v2390, %v2392
      %v2394 = vrot.slane %v2278, %v2393
      %v2397 = vunpack.c.l.s4 1983009808
      %v2398 = vunpack.c.0.s8 %v2397
      %v2399 = vlaneseq
      %v2400 = vshrl.u32 %v2399, 7
      %v2401 = vsub.s32 %v2398, %v2400
      %v2402 = vrot.slane %v2284, %v2401
      %v2403 = vcombine.low %v2394, %v2402
      %v2404 = vcombine.high %v2394, %v2402
      %v2406 = vunpack.c.l.s4 1934713408
      %v2407 = vunpack.c.0.s8 %v2406
      %v2408 = vlaneseq
      %v2409 = vshrl.u32 %v2408, 7
      %v2410 = vsub.s32 %v2407, %v2409
      %v2411 = vrot.slane %v2403, %v2410
      %v2413 = vunpack.c.l.s4 1934713408
      %v2414 = vunpack.c.0.s8 %v2413
      %v2415 = vlaneseq
      %v2416 = vshrl.u32 %v2415, 7
      %v2417 = vsub.s32 %v2414, %v2416
      %v2418 = vrot.slane %v2404, %v2417
      %v2419 = vcombine.high %v2411, 0
      %v2420 = vcombine.high %v2418, 0
      %v2422 = vunpack.c.l.b16 %v2343
      %v2423 = vpack.c.b16 %v2422, %v2422
      %2424 = vrot.lane.b32.xlu0 %v2423, 16
      %v2425 = vpop.permute.xlu0 %2424
      %v2427 = vunpack.c.l.b16 %v2317
      %v2428 = vpack.c.b16 %v2427, %v2427
      %2429 = vrot.lane.b32.xlu0 %v2428, 32
      %v2430 = vpop.permute.xlu0 %2429
      %v2432 = vunpack.c.l.b16 %v2351
      %v2433 = vpack.c.b16 %v2432, %v2432
      %2434 = vrot.lane.b32.xlu0 %v2433, 48
      %v2435 = vpop.permute.xlu0 %2434
      %v2437 = vunpack.c.l.b16 %v2316
      %v2438 = vpack.c.b16 %v2437, %v2437
      %2439 = vrot.lane.b32.xlu0 %v2438, 64
      %v2440 = vpop.permute.xlu0 %2439
      %v2442 = vunpack.c.l.b16 %v2350
      %v2443 = vpack.c.b16 %v2442, %v2442
      %2444 = vrot.lane.b32.xlu0 %v2443, 80
      %v2445 = vpop.permute.xlu0 %2444
      %v2447 = vunpack.c.l.b16 %v2318
      %v2448 = vpack.c.b16 %v2447, %v2447
      %2449 = vrot.lane.b32.xlu0 %v2448, 96
      %v2450 = vpop.permute.xlu0 %2449
      %v2452 = vunpack.c.l.b16 %v2352
      %v2453 = vpack.c.b16 %v2452, %v2452
      %2454 = vrot.lane.b32.xlu0 %v2453, 112
      %v2455 = vpop.permute.xlu0 %2454
      %v2457 = vunpack.c.l.b16 %v2411
      %v2458 = vpack.c.b16 %v2457, %v2457
      %2459 = vrot.lane.b32.xlu0 %v2458, 16
      %v2460 = vpop.permute.xlu0 %2459
      %v2462 = vunpack.c.l.b16 %v2385
      %v2463 = vpack.c.b16 %v2462, %v2462
      %2464 = vrot.lane.b32.xlu0 %v2463, 32
      %v2465 = vpop.permute.xlu0 %2464
      %v2467 = vunpack.c.l.b16 %v2419
      %v2468 = vpack.c.b16 %v2467, %v2467
      %2469 = vrot.lane.b32.xlu0 %v2468, 48
      %v2470 = vpop.permute.xlu0 %2469
      %v2472 = vunpack.c.l.b16 %v2384
      %v2473 = vpack.c.b16 %v2472, %v2472
      %2474 = vrot.lane.b32.xlu0 %v2473, 64
      %v2475 = vpop.permute.xlu0 %2474
      %v2477 = vunpack.c.l.b16 %v2418
      %v2478 = vpack.c.b16 %v2477, %v2477
      %2479 = vrot.lane.b32.xlu0 %v2478, 80
      %v2480 = vpop.permute.xlu0 %2479
      %v2482 = vunpack.c.l.b16 %v2386
      %v2483 = vpack.c.b16 %v2482, %v2482
      %2484 = vrot.lane.b32.xlu0 %v2483, 96
      %v2485 = vpop.permute.xlu0 %2484
      %v2487 = vunpack.c.l.b16 %v2420
      %v2488 = vpack.c.b16 %v2487, %v2487
      %2489 = vrot.lane.b32.xlu0 %v2488, 112
      %v2490 = vpop.permute.xlu0 %2489
      %v2493 = vsel %vm425, %v2309, %v2425
      %v2495 = vsel %vm429, %v2493, %v2430
      %v2497 = vsel %vm432, %v2495, %v2435
      %v2499 = vsel %vm435, %v2497, %v2440
      %v2501 = vsel %vm438, %v2499, %v2445
      %v2503 = vsel %vm441, %v2501, %v2450
      %v2505 = vsel %vm444, %v2503, %v2455
      %v2508 = vsel %vm425, %v2377, %v2460
      %v2510 = vsel %vm429, %v2508, %v2465
      %v2512 = vsel %vm432, %v2510, %v2470
      %v2514 = vsel %vm435, %v2512, %v2475
      %v2516 = vsel %vm438, %v2514, %v2480
      %v2518 = vsel %vm441, %v2516, %v2485
      %v2520 = vsel %vm444, %v2518, %v2490
      %s2521 = scalar_lea.vmem %s1, 24
      %v2522 = vld [vmem:[%s2521] sm:$0xf]
      %v2524 = vsel %vm749, %v2522, 0
      %v2526 = vsel %vm753, %v2505, 0
      %v2528 = vsel %vm753, %v2520, 0
      %2530 = vmatprep.subr.bf16.mxu0 0
      %2531 = vmatpush1.bf16.msra.mxu0 0
      %2532 = vmatprep.subr.bf16.mxu0 0
      %2533 = vmatpush1.bf16.msra.mxu0 0
      %2534 = vmatprep.subr.bf16.mxu0 0
      %2535 = vmatpush1.bf16.msra.mxu0 0
      %2536 = vmatprep.subr.bf16.mxu0 0
      %2537 = vmatpush1.bf16.msra.mxu0 0
      %2538 = vmatprep.subr.bf16.mxu0 0
      %2539 = vmatpush1.bf16.msra.mxu0 0
      %2540 = vmatprep.subr.bf16.mxu0 0
      %2541 = vmatpush1.bf16.msra.mxu0 0
      %2542 = vmatprep.subr.bf16.mxu0 0
      %2543 = vmatpush1.bf16.msra.mxu0 0
      %2544 = vmatprep.subr.bf16.mxu0 %v2528
      %2545 = vmatpush1.bf16.msra.mxu0 %v2526
      %2546 = vmatprep.subr.bf16.mxu0 0
      %2547 = vmatpush2.bf16.msra.mxu0 0
      %2548 = vmatprep.subr.bf16.mxu0 0
      %2549 = vmatpush2.bf16.msra.mxu0 0
      %2550 = vmatprep.subr.bf16.mxu0 0
      %2551 = vmatpush2.bf16.msra.mxu0 0
      %2552 = vmatprep.subr.bf16.mxu0 0
      %2553 = vmatpush2.bf16.msra.mxu0 0
      %2554 = vmatprep.subr.bf16.mxu0 0
      %2555 = vmatpush2.bf16.msra.mxu0 0
      %2556 = vmatprep.subr.bf16.mxu0 0
      %2557 = vmatpush2.bf16.msra.mxu0 0
      %2558 = vmatprep.subr.bf16.mxu0 0
      %2559 = vmatpush2.bf16.msra.mxu0 0
      %2560 = vmatprep.subr.bf16.mxu0 0
      %2561 = vmatpush2.bf16.msra.mxu0 0
      %2562 = vmatprep.mubr.bf16.mxu0 0
      %2563 = vmatmul.mubr.bf16.gmra.mxu0 %v2524
      %v2564 = vpop.f32.mrf.mxu0
      %v2565 = vadd.f32 0.0, %v2564
      %v2566 = vpop.f32.mrf.mxu0
      %v2567 = vadd.f32 0.0, %v2566
      %v2568 = vpop.f32.mrf.mxu0
      %v2569 = vpop.f32.mrf.mxu0
      %2570 = vdwg.mxu0
      %v2571 = vadd.f32 %v2224, %v2565
      %v2572 = vadd.f32 %v2225, %v2567
      %2573 = vrot.lane.b32.xlu0 %v2236, 127
      %v2574 = vpop.permute.xlu0 %2573
      %2575 = vrot.lane.b32.xlu0 %v2239, 127
      %v2576 = vpop.permute.xlu0 %2575
      %2577 = vrot.lane.b32.xlu0 %v2243, 127
      %v2578 = vpop.permute.xlu0 %2577
      %2579 = vrot.lane.b32.xlu0 %v2246, 127
      %v2580 = vpop.permute.xlu0 %2579
      %2581 = vrot.lane.b32.xlu0 %v2250, 127
      %v2582 = vpop.permute.xlu0 %2581
      %2583 = vrot.lane.b32.xlu0 %v2253, 127
      %v2584 = vpop.permute.xlu0 %2583
      %2585 = vrot.lane.b32.xlu0 %v2257, 127
      %v2586 = vpop.permute.xlu0 %2585
      %2587 = vrot.lane.b32.xlu0 %v2260, 127
      %v2588 = vpop.permute.xlu0 %2587
      %v2591 = vpack.i.b16 %v2578, %v2574
      %v2592 = vshrl.u32 %v2574, 16
      %v2593 = vshrl.u32 %v2578, 16
      %v2594 = vpack.i.b16 %v2593, %v2592
      %v2597 = vpack.i.b16 %v2586, %v2582
      %v2598 = vshrl.u32 %v2582, 16
      %v2599 = vshrl.u32 %v2586, 16
      %v2600 = vpack.i.b16 %v2599, %v2598
      %v2603 = vpack.i.b16 %v2580, %v2576
      %v2604 = vshrl.u32 %v2576, 16
      %v2605 = vshrl.u32 %v2580, 16
      %v2606 = vpack.i.b16 %v2605, %v2604
      %v2609 = vpack.i.b16 %v2588, %v2584
      %v2610 = vshrl.u32 %v2584, 16
      %v2611 = vshrl.u32 %v2588, 16
      %v2612 = vpack.i.b16 %v2611, %v2610
      %v2615 = vunpack.c.l.s4 1983009808
      %v2616 = vunpack.c.0.s8 %v2615
      %v2617 = vlaneseq
      %v2618 = vshrl.u32 %v2617, 7
      %v2619 = vsub.s32 %v2616, %v2618
      %v2620 = vrot.slane %v2591, %v2619
      %v2623 = vunpack.c.l.s4 1983009808
      %v2624 = vunpack.c.0.s8 %v2623
      %v2625 = vlaneseq
      %v2626 = vshrl.u32 %v2625, 7
      %v2627 = vsub.s32 %v2624, %v2626
      %v2628 = vrot.slane %v2597, %v2627
      %v2629 = vcombine.low %v2620, %v2628
      %v2630 = vcombine.high %v2620, %v2628
      %v2632 = vunpack.c.l.s4 1934713408
      %v2633 = vunpack.c.0.s8 %v2632
      %v2634 = vlaneseq
      %v2635 = vshrl.u32 %v2634, 7
      %v2636 = vsub.s32 %v2633, %v2635
      %v2637 = vrot.slane %v2629, %v2636
      %v2639 = vunpack.c.l.s4 1934713408
      %v2640 = vunpack.c.0.s8 %v2639
      %v2641 = vlaneseq
      %v2642 = vshrl.u32 %v2641, 7
      %v2643 = vsub.s32 %v2640, %v2642
      %v2644 = vrot.slane %v2630, %v2643
      %v2645 = vcombine.high %v2637, 0
      %v2646 = vcombine.high %v2644, 0
      %v2649 = vunpack.c.l.s4 1983009808
      %v2650 = vunpack.c.0.s8 %v2649
      %v2651 = vlaneseq
      %v2652 = vshrl.u32 %v2651, 7
      %v2653 = vsub.s32 %v2650, %v2652
      %v2654 = vrot.slane %v2594, %v2653
      %v2657 = vunpack.c.l.s4 1983009808
      %v2658 = vunpack.c.0.s8 %v2657
      %v2659 = vlaneseq
      %v2660 = vshrl.u32 %v2659, 7
      %v2661 = vsub.s32 %v2658, %v2660
      %v2662 = vrot.slane %v2600, %v2661
      %v2663 = vcombine.low %v2654, %v2662
      %v2664 = vcombine.high %v2654, %v2662
      %v2666 = vunpack.c.l.s4 1934713408
      %v2667 = vunpack.c.0.s8 %v2666
      %v2668 = vlaneseq
      %v2669 = vshrl.u32 %v2668, 7
      %v2670 = vsub.s32 %v2667, %v2669
      %v2671 = vrot.slane %v2663, %v2670
      %v2673 = vunpack.c.l.s4 1934713408
      %v2674 = vunpack.c.0.s8 %v2673
      %v2675 = vlaneseq
      %v2676 = vshrl.u32 %v2675, 7
      %v2677 = vsub.s32 %v2674, %v2676
      %v2678 = vrot.slane %v2664, %v2677
      %v2679 = vcombine.high %v2671, 0
      %v2680 = vcombine.high %v2678, 0
      %v2683 = vunpack.c.l.s4 1983009808
      %v2684 = vunpack.c.0.s8 %v2683
      %v2685 = vlaneseq
      %v2686 = vshrl.u32 %v2685, 7
      %v2687 = vsub.s32 %v2684, %v2686
      %v2688 = vrot.slane %v2603, %v2687
      %v2691 = vunpack.c.l.s4 1983009808
      %v2692 = vunpack.c.0.s8 %v2691
      %v2693 = vlaneseq
      %v2694 = vshrl.u32 %v2693, 7
      %v2695 = vsub.s32 %v2692, %v2694
      %v2696 = vrot.slane %v2609, %v2695
      %v2697 = vcombine.low %v2688, %v2696
      %v2698 = vcombine.high %v2688, %v2696
      %v2700 = vunpack.c.l.s4 1934713408
      %v2701 = vunpack.c.0.s8 %v2700
      %v2702 = vlaneseq
      %v2703 = vshrl.u32 %v2702, 7
      %v2704 = vsub.s32 %v2701, %v2703
      %v2705 = vrot.slane %v2697, %v2704
      %v2707 = vunpack.c.l.s4 1934713408
      %v2708 = vunpack.c.0.s8 %v2707
      %v2709 = vlaneseq
      %v2710 = vshrl.u32 %v2709, 7
      %v2711 = vsub.s32 %v2708, %v2710
      %v2712 = vrot.slane %v2698, %v2711
      %v2713 = vcombine.high %v2705, 0
      %v2714 = vcombine.high %v2712, 0
      %v2717 = vunpack.c.l.s4 1983009808
      %v2718 = vunpack.c.0.s8 %v2717
      %v2719 = vlaneseq
      %v2720 = vshrl.u32 %v2719, 7
      %v2721 = vsub.s32 %v2718, %v2720
      %v2722 = vrot.slane %v2606, %v2721
      %v2725 = vunpack.c.l.s4 1983009808
      %v2726 = vunpack.c.0.s8 %v2725
      %v2727 = vlaneseq
      %v2728 = vshrl.u32 %v2727, 7
      %v2729 = vsub.s32 %v2726, %v2728
      %v2730 = vrot.slane %v2612, %v2729
      %v2731 = vcombine.low %v2722, %v2730
      %v2732 = vcombine.high %v2722, %v2730
      %v2734 = vunpack.c.l.s4 1934713408
      %v2735 = vunpack.c.0.s8 %v2734
      %v2736 = vlaneseq
      %v2737 = vshrl.u32 %v2736, 7
      %v2738 = vsub.s32 %v2735, %v2737
      %v2739 = vrot.slane %v2731, %v2738
      %v2741 = vunpack.c.l.s4 1934713408
      %v2742 = vunpack.c.0.s8 %v2741
      %v2743 = vlaneseq
      %v2744 = vshrl.u32 %v2743, 7
      %v2745 = vsub.s32 %v2742, %v2744
      %v2746 = vrot.slane %v2732, %v2745
      %v2747 = vcombine.high %v2739, 0
      %v2748 = vcombine.high %v2746, 0
      %v2750 = vunpack.c.l.b16 %v2671
      %v2751 = vpack.c.b16 %v2750, %v2750
      %2752 = vrot.lane.b32.xlu0 %v2751, 16
      %v2753 = vpop.permute.xlu0 %2752
      %v2755 = vunpack.c.l.b16 %v2645
      %v2756 = vpack.c.b16 %v2755, %v2755
      %2757 = vrot.lane.b32.xlu0 %v2756, 32
      %v2758 = vpop.permute.xlu0 %2757
      %v2760 = vunpack.c.l.b16 %v2679
      %v2761 = vpack.c.b16 %v2760, %v2760
      %2762 = vrot.lane.b32.xlu0 %v2761, 48
      %v2763 = vpop.permute.xlu0 %2762
      %v2765 = vunpack.c.l.b16 %v2644
      %v2766 = vpack.c.b16 %v2765, %v2765
      %2767 = vrot.lane.b32.xlu0 %v2766, 64
      %v2768 = vpop.permute.xlu0 %2767
      %v2770 = vunpack.c.l.b16 %v2678
      %v2771 = vpack.c.b16 %v2770, %v2770
      %2772 = vrot.lane.b32.xlu0 %v2771, 80
      %v2773 = vpop.permute.xlu0 %2772
      %v2775 = vunpack.c.l.b16 %v2646
      %v2776 = vpack.c.b16 %v2775, %v2775
      %2777 = vrot.lane.b32.xlu0 %v2776, 96
      %v2778 = vpop.permute.xlu0 %2777
      %v2780 = vunpack.c.l.b16 %v2680
      %v2781 = vpack.c.b16 %v2780, %v2780
      %2782 = vrot.lane.b32.xlu0 %v2781, 112
      %v2783 = vpop.permute.xlu0 %2782
      %v2785 = vunpack.c.l.b16 %v2739
      %v2786 = vpack.c.b16 %v2785, %v2785
      %2787 = vrot.lane.b32.xlu0 %v2786, 16
      %v2788 = vpop.permute.xlu0 %2787
      %v2790 = vunpack.c.l.b16 %v2713
      %v2791 = vpack.c.b16 %v2790, %v2790
      %2792 = vrot.lane.b32.xlu0 %v2791, 32
      %v2793 = vpop.permute.xlu0 %2792
      %v2795 = vunpack.c.l.b16 %v2747
      %v2796 = vpack.c.b16 %v2795, %v2795
      %2797 = vrot.lane.b32.xlu0 %v2796, 48
      %v2798 = vpop.permute.xlu0 %2797
      %v2800 = vunpack.c.l.b16 %v2712
      %v2801 = vpack.c.b16 %v2800, %v2800
      %2802 = vrot.lane.b32.xlu0 %v2801, 64
      %v2803 = vpop.permute.xlu0 %2802
      %v2805 = vunpack.c.l.b16 %v2746
      %v2806 = vpack.c.b16 %v2805, %v2805
      %2807 = vrot.lane.b32.xlu0 %v2806, 80
      %v2808 = vpop.permute.xlu0 %2807
      %v2810 = vunpack.c.l.b16 %v2714
      %v2811 = vpack.c.b16 %v2810, %v2810
      %2812 = vrot.lane.b32.xlu0 %v2811, 96
      %v2813 = vpop.permute.xlu0 %2812
      %v2815 = vunpack.c.l.b16 %v2748
      %v2816 = vpack.c.b16 %v2815, %v2815
      %2817 = vrot.lane.b32.xlu0 %v2816, 112
      %v2818 = vpop.permute.xlu0 %2817
      %v2821 = vsel %vm425, %v2637, %v2753
      %v2823 = vsel %vm429, %v2821, %v2758
      %v2825 = vsel %vm432, %v2823, %v2763
      %v2827 = vsel %vm435, %v2825, %v2768
      %v2829 = vsel %vm438, %v2827, %v2773
      %v2831 = vsel %vm441, %v2829, %v2778
      %v2833 = vsel %vm444, %v2831, %v2783
      %v2836 = vsel %vm425, %v2705, %v2788
      %v2838 = vsel %vm429, %v2836, %v2793
      %v2840 = vsel %vm432, %v2838, %v2798
      %v2842 = vsel %vm435, %v2840, %v2803
      %v2844 = vsel %vm438, %v2842, %v2808
      %v2846 = vsel %vm441, %v2844, %v2813
      %v2848 = vsel %vm444, %v2846, %v2818
      %s2849 = scalar_lea.vmem %s1, 28
      %v2850 = vld [vmem:[%s2849] sm:$0xf]
      %v2852 = vsel %vm749, %v2850, 0
      %v2854 = vsel %vm753, %v2833, 0
      %v2856 = vsel %vm753, %v2848, 0
      %2858 = vmatprep.subr.bf16.mxu0 0
      %2859 = vmatpush1.bf16.msra.mxu0 0
      %2860 = vmatprep.subr.bf16.mxu0 0
      %2861 = vmatpush1.bf16.msra.mxu0 0
      %2862 = vmatprep.subr.bf16.mxu0 0
      %2863 = vmatpush1.bf16.msra.mxu0 0
      %2864 = vmatprep.subr.bf16.mxu0 0
      %2865 = vmatpush1.bf16.msra.mxu0 0
      %2866 = vmatprep.subr.bf16.mxu0 0
      %2867 = vmatpush1.bf16.msra.mxu0 0
      %2868 = vmatprep.subr.bf16.mxu0 0
      %2869 = vmatpush1.bf16.msra.mxu0 0
      %2870 = vmatprep.subr.bf16.mxu0 0
      %2871 = vmatpush1.bf16.msra.mxu0 0
      %2872 = vmatprep.subr.bf16.mxu0 %v2856
      %2873 = vmatpush1.bf16.msra.mxu0 %v2854
      %2874 = vmatprep.subr.bf16.mxu0 0
      %2875 = vmatpush2.bf16.msra.mxu0 0
      %2876 = vmatprep.subr.bf16.mxu0 0
      %2877 = vmatpush2.bf16.msra.mxu0 0
      %2878 = vmatprep.subr.bf16.mxu0 0
      %2879 = vmatpush2.bf16.msra.mxu0 0
      %2880 = vmatprep.subr.bf16.mxu0 0
      %2881 = vmatpush2.bf16.msra.mxu0 0
      %2882 = vmatprep.subr.bf16.mxu0 0
      %2883 = vmatpush2.bf16.msra.mxu0 0
      %2884 = vmatprep.subr.bf16.mxu0 0
      %2885 = vmatpush2.bf16.msra.mxu0 0
      %2886 = vmatprep.subr.bf16.mxu0 0
      %2887 = vmatpush2.bf16.msra.mxu0 0
      %2888 = vmatprep.subr.bf16.mxu0 0
      %2889 = vmatpush2.bf16.msra.mxu0 0
      %2890 = vmatprep.mubr.bf16.mxu0 0
      %2891 = vmatmul.mubr.bf16.gmra.mxu0 %v2852
      %v2892 = vpop.f32.mrf.mxu0
      %v2893 = vadd.f32 0.0, %v2892
      %v2894 = vpop.f32.mrf.mxu0
      %v2895 = vadd.f32 0.0, %v2894
      %v2896 = vpop.f32.mrf.mxu0
      %v2897 = vpop.f32.mrf.mxu0
      %2898 = vdwg.mxu0
      %v2899 = vadd.f32 %v2571, %v2893
      %v2900 = vadd.f32 %v2572, %v2895
      %2901 = vrot.lane.b32.xlu0 %v2236, 126
      %v2902 = vpop.permute.xlu0 %2901
      %2903 = vrot.lane.b32.xlu0 %v2239, 126
      %v2904 = vpop.permute.xlu0 %2903
      %2905 = vrot.lane.b32.xlu0 %v2243, 126
      %v2906 = vpop.permute.xlu0 %2905
      %2907 = vrot.lane.b32.xlu0 %v2246, 126
      %v2908 = vpop.permute.xlu0 %2907
      %2909 = vrot.lane.b32.xlu0 %v2250, 126
      %v2910 = vpop.permute.xlu0 %2909
      %2911 = vrot.lane.b32.xlu0 %v2253, 126
      %v2912 = vpop.permute.xlu0 %2911
      %2913 = vrot.lane.b32.xlu0 %v2257, 126
      %v2914 = vpop.permute.xlu0 %2913
      %2915 = vrot.lane.b32.xlu0 %v2260, 126
      %v2916 = vpop.permute.xlu0 %2915
      %v2919 = vpack.i.b16 %v2906, %v2902
      %v2920 = vshrl.u32 %v2902, 16
      %v2921 = vshrl.u32 %v2906, 16
      %v2922 = vpack.i.b16 %v2921, %v2920
      %v2925 = vpack.i.b16 %v2914, %v2910
      %v2926 = vshrl.u32 %v2910, 16
      %v2927 = vshrl.u32 %v2914, 16
      %v2928 = vpack.i.b16 %v2927, %v2926
      %v2931 = vpack.i.b16 %v2908, %v2904
      %v2932 = vshrl.u32 %v2904, 16
      %v2933 = vshrl.u32 %v2908, 16
      %v2934 = vpack.i.b16 %v2933, %v2932
      %v2937 = vpack.i.b16 %v2916, %v2912
      %v2938 = vshrl.u32 %v2912, 16
      %v2939 = vshrl.u32 %v2916, 16
      %v2940 = vpack.i.b16 %v2939, %v2938
      %v2943 = vunpack.c.l.s4 1983009808
      %v2944 = vunpack.c.0.s8 %v2943
      %v2945 = vlaneseq
      %v2946 = vshrl.u32 %v2945, 7
      %v2947 = vsub.s32 %v2944, %v2946
      %v2948 = vrot.slane %v2919, %v2947
      %v2951 = vunpack.c.l.s4 1983009808
      %v2952 = vunpack.c.0.s8 %v2951
      %v2953 = vlaneseq
      %v2954 = vshrl.u32 %v2953, 7
      %v2955 = vsub.s32 %v2952, %v2954
      %v2956 = vrot.slane %v2925, %v2955
      %v2957 = vcombine.low %v2948, %v2956
      %v2958 = vcombine.high %v2948, %v2956
      %v2960 = vunpack.c.l.s4 1934713408
      %v2961 = vunpack.c.0.s8 %v2960
      %v2962 = vlaneseq
      %v2963 = vshrl.u32 %v2962, 7
      %v2964 = vsub.s32 %v2961, %v2963
      %v2965 = vrot.slane %v2957, %v2964
      %v2967 = vunpack.c.l.s4 1934713408
      %v2968 = vunpack.c.0.s8 %v2967
      %v2969 = vlaneseq
      %v2970 = vshrl.u32 %v2969, 7
      %v2971 = vsub.s32 %v2968, %v2970
      %v2972 = vrot.slane %v2958, %v2971
      %v2973 = vcombine.high %v2965, 0
      %v2974 = vcombine.high %v2972, 0
      %v2977 = vunpack.c.l.s4 1983009808
      %v2978 = vunpack.c.0.s8 %v2977
      %v2979 = vlaneseq
      %v2980 = vshrl.u32 %v2979, 7
      %v2981 = vsub.s32 %v2978, %v2980
      %v2982 = vrot.slane %v2922, %v2981
      %v2985 = vunpack.c.l.s4 1983009808
      %v2986 = vunpack.c.0.s8 %v2985
      %v2987 = vlaneseq
      %v2988 = vshrl.u32 %v2987, 7
      %v2989 = vsub.s32 %v2986, %v2988
      %v2990 = vrot.slane %v2928, %v2989
      %v2991 = vcombine.low %v2982, %v2990
      %v2992 = vcombine.high %v2982, %v2990
      %v2994 = vunpack.c.l.s4 1934713408
      %v2995 = vunpack.c.0.s8 %v2994
      %v2996 = vlaneseq
      %v2997 = vshrl.u32 %v2996, 7
      %v2998 = vsub.s32 %v2995, %v2997
      %v2999 = vrot.slane %v2991, %v2998
      %v3001 = vunpack.c.l.s4 1934713408
      %v3002 = vunpack.c.0.s8 %v3001
      %v3003 = vlaneseq
      %v3004 = vshrl.u32 %v3003, 7
      %v3005 = vsub.s32 %v3002, %v3004
      %v3006 = vrot.slane %v2992, %v3005
      %v3007 = vcombine.high %v2999, 0
      %v3008 = vcombine.high %v3006, 0
      %v3011 = vunpack.c.l.s4 1983009808
      %v3012 = vunpack.c.0.s8 %v3011
      %v3013 = vlaneseq
      %v3014 = vshrl.u32 %v3013, 7
      %v3015 = vsub.s32 %v3012, %v3014
      %v3016 = vrot.slane %v2931, %v3015
      %v3019 = vunpack.c.l.s4 1983009808
      %v3020 = vunpack.c.0.s8 %v3019
      %v3021 = vlaneseq
      %v3022 = vshrl.u32 %v3021, 7
      %v3023 = vsub.s32 %v3020, %v3022
      %v3024 = vrot.slane %v2937, %v3023
      %v3025 = vcombine.low %v3016, %v3024
      %v3026 = vcombine.high %v3016, %v3024
      %v3028 = vunpack.c.l.s4 1934713408
      %v3029 = vunpack.c.0.s8 %v3028
      %v3030 = vlaneseq
      %v3031 = vshrl.u32 %v3030, 7
      %v3032 = vsub.s32 %v3029, %v3031
      %v3033 = vrot.slane %v3025, %v3032
      %v3035 = vunpack.c.l.s4 1934713408
      %v3036 = vunpack.c.0.s8 %v3035
      %v3037 = vlaneseq
      %v3038 = vshrl.u32 %v3037, 7
      %v3039 = vsub.s32 %v3036, %v3038
      %v3040 = vrot.slane %v3026, %v3039
      %v3041 = vcombine.high %v3033, 0
      %v3042 = vcombine.high %v3040, 0
      %v3045 = vunpack.c.l.s4 1983009808
      %v3046 = vunpack.c.0.s8 %v3045
      %v3047 = vlaneseq
      %v3048 = vshrl.u32 %v3047, 7
      %v3049 = vsub.s32 %v3046, %v3048
      %v3050 = vrot.slane %v2934, %v3049
      %v3053 = vunpack.c.l.s4 1983009808
      %v3054 = vunpack.c.0.s8 %v3053
      %v3055 = vlaneseq
      %v3056 = vshrl.u32 %v3055, 7
      %v3057 = vsub.s32 %v3054, %v3056
      %v3058 = vrot.slane %v2940, %v3057
      %v3059 = vcombine.low %v3050, %v3058
      %v3060 = vcombine.high %v3050, %v3058
      %v3062 = vunpack.c.l.s4 1934713408
      %v3063 = vunpack.c.0.s8 %v3062
      %v3064 = vlaneseq
      %v3065 = vshrl.u32 %v3064, 7
      %v3066 = vsub.s32 %v3063, %v3065
      %v3067 = vrot.slane %v3059, %v3066
      %v3069 = vunpack.c.l.s4 1934713408
      %v3070 = vunpack.c.0.s8 %v3069
      %v3071 = vlaneseq
      %v3072 = vshrl.u32 %v3071, 7
      %v3073 = vsub.s32 %v3070, %v3072
      %v3074 = vrot.slane %v3060, %v3073
      %v3075 = vcombine.high %v3067, 0
      %v3076 = vcombine.high %v3074, 0
      %v3078 = vunpack.c.l.b16 %v2999
      %v3079 = vpack.c.b16 %v3078, %v3078
      %3080 = vrot.lane.b32.xlu0 %v3079, 16
      %v3081 = vpop.permute.xlu0 %3080
      %v3083 = vunpack.c.l.b16 %v2973
      %v3084 = vpack.c.b16 %v3083, %v3083
      %3085 = vrot.lane.b32.xlu0 %v3084, 32
      %v3086 = vpop.permute.xlu0 %3085
      %v3088 = vunpack.c.l.b16 %v3007
      %v3089 = vpack.c.b16 %v3088, %v3088
      %3090 = vrot.lane.b32.xlu0 %v3089, 48
      %v3091 = vpop.permute.xlu0 %3090
      %v3093 = vunpack.c.l.b16 %v2972
      %v3094 = vpack.c.b16 %v3093, %v3093
      %3095 = vrot.lane.b32.xlu0 %v3094, 64
      %v3096 = vpop.permute.xlu0 %3095
      %v3098 = vunpack.c.l.b16 %v3006
      %v3099 = vpack.c.b16 %v3098, %v3098
      %3100 = vrot.lane.b32.xlu0 %v3099, 80
      %v3101 = vpop.permute.xlu0 %3100
      %v3103 = vunpack.c.l.b16 %v2974
      %v3104 = vpack.c.b16 %v3103, %v3103
      %3105 = vrot.lane.b32.xlu0 %v3104, 96
      %v3106 = vpop.permute.xlu0 %3105
      %v3108 = vunpack.c.l.b16 %v3008
      %v3109 = vpack.c.b16 %v3108, %v3108
      %3110 = vrot.lane.b32.xlu0 %v3109, 112
      %v3111 = vpop.permute.xlu0 %3110
      %v3113 = vunpack.c.l.b16 %v3067
      %v3114 = vpack.c.b16 %v3113, %v3113
      %3115 = vrot.lane.b32.xlu0 %v3114, 16
      %v3116 = vpop.permute.xlu0 %3115
      %v3118 = vunpack.c.l.b16 %v3041
      %v3119 = vpack.c.b16 %v3118, %v3118
      %3120 = vrot.lane.b32.xlu0 %v3119, 32
      %v3121 = vpop.permute.xlu0 %3120
      %v3123 = vunpack.c.l.b16 %v3075
      %v3124 = vpack.c.b16 %v3123, %v3123
      %3125 = vrot.lane.b32.xlu0 %v3124, 48
      %v3126 = vpop.permute.xlu0 %3125
      %v3128 = vunpack.c.l.b16 %v3040
      %v3129 = vpack.c.b16 %v3128, %v3128
      %3130 = vrot.lane.b32.xlu0 %v3129, 64
      %v3131 = vpop.permute.xlu0 %3130
      %v3133 = vunpack.c.l.b16 %v3074
      %v3134 = vpack.c.b16 %v3133, %v3133
      %3135 = vrot.lane.b32.xlu0 %v3134, 80
      %v3136 = vpop.permute.xlu0 %3135
      %v3138 = vunpack.c.l.b16 %v3042
      %v3139 = vpack.c.b16 %v3138, %v3138
      %3140 = vrot.lane.b32.xlu0 %v3139, 96
      %v3141 = vpop.permute.xlu0 %3140
      %v3143 = vunpack.c.l.b16 %v3076
      %v3144 = vpack.c.b16 %v3143, %v3143
      %3145 = vrot.lane.b32.xlu0 %v3144, 112
      %v3146 = vpop.permute.xlu0 %3145
      %v3149 = vsel %vm425, %v2965, %v3081
      %v3151 = vsel %vm429, %v3149, %v3086
      %v3153 = vsel %vm432, %v3151, %v3091
      %v3155 = vsel %vm435, %v3153, %v3096
      %v3157 = vsel %vm438, %v3155, %v3101
      %v3159 = vsel %vm441, %v3157, %v3106
      %v3161 = vsel %vm444, %v3159, %v3111
      %v3164 = vsel %vm425, %v3033, %v3116
      %v3166 = vsel %vm429, %v3164, %v3121
      %v3168 = vsel %vm432, %v3166, %v3126
      %v3170 = vsel %vm435, %v3168, %v3131
      %v3172 = vsel %vm438, %v3170, %v3136
      %v3174 = vsel %vm441, %v3172, %v3141
      %v3176 = vsel %vm444, %v3174, %v3146
      %s3177 = scalar_lea.vmem %s1, 32
      %v3178 = vld [vmem:[%s3177] sm:$0xf]
      %v3180 = vsel %vm749, %v3178, 0
      %v3182 = vsel %vm753, %v3161, 0
      %v3184 = vsel %vm753, %v3176, 0
      %3186 = vmatprep.subr.bf16.mxu0 0
      %3187 = vmatpush1.bf16.msra.mxu0 0
      %3188 = vmatprep.subr.bf16.mxu0 0
      %3189 = vmatpush1.bf16.msra.mxu0 0
      %3190 = vmatprep.subr.bf16.mxu0 0
      %3191 = vmatpush1.bf16.msra.mxu0 0
      %3192 = vmatprep.subr.bf16.mxu0 0
      %3193 = vmatpush1.bf16.msra.mxu0 0
      %3194 = vmatprep.subr.bf16.mxu0 0
      %3195 = vmatpush1.bf16.msra.mxu0 0
      %3196 = vmatprep.subr.bf16.mxu0 0
      %3197 = vmatpush1.bf16.msra.mxu0 0
      %3198 = vmatprep.subr.bf16.mxu0 0
      %3199 = vmatpush1.bf16.msra.mxu0 0
      %3200 = vmatprep.subr.bf16.mxu0 %v3184
      %3201 = vmatpush1.bf16.msra.mxu0 %v3182
      %3202 = vmatprep.subr.bf16.mxu0 0
      %3203 = vmatpush2.bf16.msra.mxu0 0
      %3204 = vmatprep.subr.bf16.mxu0 0
      %3205 = vmatpush2.bf16.msra.mxu0 0
      %3206 = vmatprep.subr.bf16.mxu0 0
      %3207 = vmatpush2.bf16.msra.mxu0 0
      %3208 = vmatprep.subr.bf16.mxu0 0
      %3209 = vmatpush2.bf16.msra.mxu0 0
      %3210 = vmatprep.subr.bf16.mxu0 0
      %3211 = vmatpush2.bf16.msra.mxu0 0
      %3212 = vmatprep.subr.bf16.mxu0 0
      %3213 = vmatpush2.bf16.msra.mxu0 0
      %3214 = vmatprep.subr.bf16.mxu0 0
      %3215 = vmatpush2.bf16.msra.mxu0 0
      %3216 = vmatprep.subr.bf16.mxu0 0
      %3217 = vmatpush2.bf16.msra.mxu0 0
      %3218 = vmatprep.mubr.bf16.mxu0 0
      %3219 = vmatmul.mubr.bf16.gmra.mxu0 %v3180
      %v3220 = vpop.f32.mrf.mxu0
      %v3221 = vadd.f32 0.0, %v3220
      %v3222 = vpop.f32.mrf.mxu0
      %v3223 = vadd.f32 0.0, %v3222
      %v3224 = vpop.f32.mrf.mxu0
      %v3225 = vpop.f32.mrf.mxu0
      %3226 = vdwg.mxu0
      %v3227 = vadd.f32 %v2899, %v3221
      %v3228 = vadd.f32 %v2900, %v3223
      %3229 = vst [vmem:[%s177] sm:$0xff] %v3227
      %3230 = vst [vmem:[%s177 + $0x8] sm:$0xff] %v3228
      %v3231 = vadd.f32 %v3227, %v3228
      %3232 = vadd.xlane.f32.xlu0 %v3231
      %v3233 = vpop.xlane.xlu0 %3232
      %v3234 = vmul.f32 %v3227, %v3227
      %v3235 = vmul.f32 %v3228, %v3228
      %v3236 = vadd.f32 %v3234, %v3235
      %3237 = vadd.xlane.f32.xlu0 %v3236
      %v3238 = vpop.xlane.xlu0 %3237
      %vm3239 = vcmask 7168
      %v3240 = vsel %vm3239, %v3233, %v3238
      %vm3241 = vcmask 15360
      %3242 = vst.msk [vmem:[%s181] sm:$0xff] %vm3241, %v3240
      %p3243 = scmp.lt.s32.totalorder %s15, 1
      %s3244 = scalar_select %p3243, %s15, 1
      %s3245 = smul.addr %s3244, 2
      %s3246 = smul.addr %s3245, 8
      %s3247 = scalar_lea.vmem %s2, %s3246
      %p3248 = scmp.lt.s32.totalorder %s15, 1
      %s3249 = scalar_select %p3248, %s15, 1
      %s3250 = smul.addr %s3249, 8
      %s3251 = scalar_lea.vmem %s3, %s3250
      // Predicated region
      $region29: #{cbrblock_forward.2} parent=27 // pred_check
        %p3252 = pneg %p80
      $region30: #{cbrblock_forward.2} parent=27 // pred_check_branch
        %3254 = sbr.rel (%p3252) target = $region32
      $region31: #{cbrblock_forward.2} parent=27 // pred_region
        _
      $region32: #{cbrblock_forward.2} parent=27 // pred_fallthru
        _
      // Predicated region
      $region33: #{cbrblock_forward.2} parent=27 // pred_check
        %p3255 = pneg %p106
      $region34: #{cbrblock_forward.2} parent=27 // pred_check_branch
        %3257 = sbr.rel (%p3255) target = $region36
      $region35: #{cbrblock_forward.2} parent=27 // pred_region
        _
      $region36: #{cbrblock_forward.2} parent=27 // pred_fallthru
        _
    $region28: #{cbrblock_forward.2} parent=5 // pred_fallthru
      _
    %p3258 = scmp.le.s32.totalorder 2, %s10
    // Predicated region
    $region37: #{cbrblock_forward.2} parent=5 // pred_check
      %p3259 = pneg %p3258
    $region38: #{cbrblock_forward.2} parent=5 // pred_check_branch
      %3261 = sbr.rel (%p3259) target = $region40
    $region39: #{cbrblock_forward.2} parent=5 // pred_region
      %s3262 = ssub.s32 %s10, 2
      // Predicated region
      $region41: #{cbrblock_forward.2} parent=39 // pred_check
        %p3263 = pneg %p86
      $region42: #{cbrblock_forward.2} parent=39 // pred_check_branch
        %3265 = sbr.rel (%p3263) target = $region44
      $region43: #{cbrblock_forward.2} parent=39 // pred_region
        %p3266 = scmp.lt.s32.totalorder %s16, 1
        %s3267 = scalar_select %p3266, %s16, 1
        %s3268 = smul.addr %s3267, 2
        %s3269 = smul.addr %s3268, 8
        %s3270 = scalar_lea.vmem %s2, %s3269
      $region44: #{cbrblock_forward.2} parent=39 // pred_fallthru
        _
      // Predicated region
      $region45: #{cbrblock_forward.2} parent=39 // pred_check
        %p3271 = pneg %p112
      $region46: #{cbrblock_forward.2} parent=39 // pred_check_branch
        %3273 = sbr.rel (%p3271) target = $region48
      $region47: #{cbrblock_forward.2} parent=39 // pred_region
        %p3274 = scmp.lt.s32.totalorder %s16, 1
        %s3275 = scalar_select %p3274, %s16, 1
        %s3276 = smul.addr %s3275, 8
        %s3277 = scalar_lea.vmem %s3, %s3276
      $region48: #{cbrblock_forward.2} parent=39 // pred_fallthru
        _
    $region40: #{cbrblock_forward.2} parent=5 // pred_fallthru
      _
  $region6: #{cbrblock_forward.2} parent=0 // loop_footer
    %s14 = sadd.s32 1, %s10
  $region7: #{cbrblock_forward.2} parent=0 // loop_footer_branch
    %9 = sbr.rel target = $region3
  $region8: #{cbrblock_forward.2} parent=0 // loop_exit
    _

</llo_original>
